<compile_context>
chip_gen: v6e
topology: v6e:2x2x1
jax: 0.10.0
libtpu: 0.0.40
codegen_flags: <defaults>
</compile_context>

<pallas_src>
import functools

import jax
import jax.numpy as jnp
from jax import lax
from jax.experimental import pallas as pl
from jax.experimental.pallas import tpu as pltpu


def resnet_block_kernel(x_ref, w1_ref, b1_ref, w2_ref, b2_ref, w3_ref, b3_ref,
                        mask_ref, o_ref, *, W, L):
    x = x_ref[...]                                            # (C, L), lane = L

    # --- conv1: 1x1 conv == (C, C) @ (C, L) channel matmul + bias + ReLU -----
    h1 = jnp.dot(w1_ref[...], x, preferred_element_type=jnp.float32)
    h1 = jnp.maximum(h1 + b1_ref[...], 0.0)                   # (C, L)

    # --- conv2: 3x3 conv, padding=1 -------------------------------------------
    # Nine taps = static lane rolls of h1, each multiplied by its precomputed
    # zero-pad mask (VMEM-resident input), then nine small (C,C)@(C,L) matmuls
    # accumulated in f32.  No sublane concat, no in-kernel iota/masks.
    acc = None
    for t in range(9):
        dy, dx = t // 3 - 1, t % 3 - 1
        off = dy * W + dx                                     # static lane offset
        shift = (-off) % L                                    # out[p] = h1[p + off]
        shifted = pltpu.roll(h1, shift, 1) if shift else h1
        if dy == 0 and dx == 0:
            col = shifted                                     # center tap: mask == 1
        else:
            col = shifted * mask_ref[t]                       # (C, L) * (1, L)
        part = jnp.dot(w2_ref[t], col, preferred_element_type=jnp.float32)
        acc = part if acc is None else acc + part
    h2 = jnp.maximum(acc + b2_ref[...], 0.0)                  # (C, L)

    # --- conv3: 1x1 conv + bias + residual; single wide lane-dense store -----
    h3 = jnp.dot(w3_ref[...], h2, preferred_element_type=jnp.float32) + b3_ref[...]
    o_ref[...] = (h3 + x).astype(o_ref.dtype)


def _conv3x3_tap_masks(H, W, images_per_block):
    """(9, 1, B*H*W) f32 masks: 1 where a tap's source pixel lies inside the image."""
    HW = H * W
    q = jnp.arange(HW)
    yy, xx = q // W, q % W
    rows = []
    for dy in range(-1, 2):
        for dx in range(-1, 2):
            valid = ((yy + dy >= 0) & (yy + dy < H) &
                     (xx + dx >= 0) & (xx + dx < W))
            rows.append(valid.astype(jnp.float32))
    m = jnp.stack(rows, axis=0)                               # (9, HW)
    m = jnp.tile(m, (1, images_per_block))                    # (9, B*HW)
    return m.reshape(9, 1, images_per_block * HW)


def resnet_block(x, w1, b1, w2, b2, w3, b3, num_lane_blocks=2):
    """x: (N, C, H, W) NCHW (PyTorch layout).
    w1/w3: (C, C, 1, 1) OIHW.  w2: (C, C, 3, 3) OIHW.  b*: (C,)."""
    N, C, H, W = x.shape
    HW = H * W

    # Grid: at most `num_lane_blocks` fat lane super-blocks (2 keeps both v7x
    # TensorCores busy; per-step overhead dominates compute at this size so we
    # want as few, as fat, steps as possible).
    nb = max(1, min(num_lane_blocks, N))
    while N % nb:
        nb -= 1
    B = N // nb                       # images per grid step
    L = B * HW                        # lane width per block (multiple of 128 here)

    # Wrapper-side layout plumbing: lane-dense (C, N*HW) slab; image n owns
    # lanes [n*HW, (n+1)*HW).  Weights flattened so each conv is one matmul
    # (conv2 as 9 per-tap (C_out, C_in) matrices, tap-major).
    x2 = jnp.transpose(x.reshape(N, C, HW), (1, 0, 2)).reshape(C, N * HW)
    w1m = w1.reshape(C, C)
    w3m = w3.reshape(C, C)
    w2t = jnp.transpose(w2, (2, 3, 0, 1)).reshape(9, C, C)    # [tap, C_out, C_in]
    b1c, b2c, b3c = (b.reshape(C, 1) for b in (b1, b2, b3))
    mask = _conv3x3_tap_masks(H, W, B)                        # (9, 1, L), VMEM-resident

    kernel = functools.partial(resnet_block_kernel, W=W, L=L)
    const2 = lambda i: (0, 0)
    cost = pl.CostEstimate(
        flops=2 * N * HW * 11 * C * C,                        # conv1 + 9-tap conv2 + conv3
        transcendentals=0,
        bytes_accessed=(2 * N * C * HW + 11 * C * C + 3 * C + 9 * HW) * 4)

    out = pl.pallas_call(
        kernel,
        out_shape=jax.ShapeDtypeStruct((C, N * HW), x.dtype),
        grid=(nb,),
        in_specs=[
            pl.BlockSpec((C, L), lambda i: (0, i)),           # x slab
            pl.BlockSpec((C, C), const2),                     # w1
            pl.BlockSpec((C, 1), const2),                     # b1
            pl.BlockSpec((9, C, C), lambda i: (0, 0, 0)),     # w2 (per-tap)
            pl.BlockSpec((C, 1), const2),                     # b2
            pl.BlockSpec((C, C), const2),                     # w3
            pl.BlockSpec((C, 1), const2),                     # b3
            pl.BlockSpec((9, 1, L), lambda i: (0, 0, 0)),     # tap masks
        ],
        out_specs=pl.BlockSpec((C, L), lambda i: (0, i)),
        compiler_params=pltpu.CompilerParams(
            dimension_semantics=("parallel",)),
        cost_estimate=cost,
    )(x2, w1m, b1c, w2t, b2c, w3m, b3c, mask)

    return jnp.transpose(out.reshape(C, N, HW), (1, 0, 2)).reshape(N, C, H, W)


def ref_resnet_block(x, w1, b1, w2, b2, w3, b3):
    """Pure-JAX reference with PyTorch Conv2d semantics (NCHW / OIHW)."""
    dn = ("NCHW", "OIHW", "NCHW")
    h = lax.conv_general_dilated(x, w1, (1, 1), "VALID", dimension_numbers=dn)
    h = jnp.maximum(h + b1[None, :, None, None], 0.0)
    h = lax.conv_general_dilated(h, w2, (1, 1), ((1, 1), (1, 1)),
                                 dimension_numbers=dn)
    h = jnp.maximum(h + b2[None, :, None, None], 0.0)
    h = lax.conv_general_dilated(h, w3, (1, 1), "VALID", dimension_numbers=dn)
    h = h + b3[None, :, None, None]
    return h + x


if __name__ == "__main__":
    N, C, H, W = 2, 4, 16, 16  # n_filters = 4

    key = jax.random.PRNGKey(0)
    kx, k1w, k1b, k2w, k2b, k3w, k3b = jax.random.split(key, 7)

    x = jax.random.normal(kx, (N, C, H, W), dtype=jnp.float32)

    # Deterministic parameter init (PyTorch-style uniform bounds).
    bound1 = 1.0 / (C ** 0.5)           # fan_in = C * 1 * 1
    bound2 = 1.0 / ((C * 9) ** 0.5)     # fan_in = C * 3 * 3
    w1 = jax.random.uniform(k1w, (C, C, 1, 1), jnp.float32, -bound1, bound1)
    b1 = jax.random.uniform(k1b, (C,), jnp.float32, -bound1, bound1)
    w2 = jax.random.uniform(k2w, (C, C, 3, 3), jnp.float32, -bound2, bound2)
    b2 = jax.random.uniform(k2b, (C,), jnp.float32, -bound2, bound2)
    w3 = jax.random.uniform(k3w, (C, C, 1, 1), jnp.float32, -bound1, bound1)
    b3 = jax.random.uniform(k3b, (C,), jnp.float32, -bound1, bound1)

    out = jax.block_until_ready(resnet_block(x, w1, b1, w2, b2, w3, b3))
    ref = ref_resnet_block(x, w1, b1, w2, b2, w3, b3)
    assert out.shape == (N, C, H, W)
    assert float(jnp.max(jnp.abs(out - ref))) < 1e-4

    print("KERNEL_OK")
</pallas_src>

<mosaic_0001>
module attributes {stable_mosaic.version = 11 : i64} {
  func.func @resnet_block_kernel(%arg0: i32, %arg1: memref<4x256xf32, #tpu.memory_space<vmem>>, %arg2: memref<4x4xf32, #tpu.memory_space<vmem>>, %arg3: memref<4x1xf32, #tpu.memory_space<vmem>>, %arg4: memref<9x4x4xf32, #tpu.memory_space<vmem>>, %arg5: memref<4x1xf32, #tpu.memory_space<vmem>>, %arg6: memref<4x4xf32, #tpu.memory_space<vmem>>, %arg7: memref<4x1xf32, #tpu.memory_space<vmem>>, %arg8: memref<9x1x256xf32, #tpu.memory_space<vmem>>, %arg9: memref<4x256xf32, #tpu.memory_space<vmem>>) attributes {dimension_semantics = [#tpu.dimension_semantics<parallel>], iteration_bounds = array<i64: 2>, scalar_prefetch = 0 : i64, scratch_operands = 0 : i64, tpu.core_type = #tpu.core_type<tc>, window_params = [{transform_indices = @transform_0, window_bounds = array<i64: 4, 256>}, {pipeline_mode = #tpu.pipeline_mode<synchronous>, transform_indices = @transform_1, window_bounds = array<i64: 4, 4>}, {pipeline_mode = #tpu.pipeline_mode<synchronous>, transform_indices = @transform_2, window_bounds = array<i64: 4, 1>}, {pipeline_mode = #tpu.pipeline_mode<synchronous>, transform_indices = @transform_3, window_bounds = array<i64: 9, 4, 4>}, {pipeline_mode = #tpu.pipeline_mode<synchronous>, transform_indices = @transform_4, window_bounds = array<i64: 4, 1>}, {pipeline_mode = #tpu.pipeline_mode<synchronous>, transform_indices = @transform_5, window_bounds = array<i64: 4, 4>}, {pipeline_mode = #tpu.pipeline_mode<synchronous>, transform_indices = @transform_6, window_bounds = array<i64: 4, 1>}, {pipeline_mode = #tpu.pipeline_mode<synchronous>, transform_indices = @transform_7, window_bounds = array<i64: 9, 1, 256>}, {transform_indices = @transform_8, window_bounds = array<i64: 4, 256>}]} {
    %c0 = arith.constant 0 : index
    %c0_0 = arith.constant 0 : index
    %0 = vector.load %arg1[%c0, %c0_0] : memref<4x256xf32, #tpu.memory_space<vmem>>, vector<4x256xf32>
    %c0_1 = arith.constant 0 : index
    %c0_2 = arith.constant 0 : index
    %1 = vector.load %arg2[%c0_1, %c0_2] : memref<4x4xf32, #tpu.memory_space<vmem>>, vector<4x4xf32>
    %cst = arith.constant dense<0.000000e+00> : vector<4x256xf32>
    %2 = tpu.matmul %1, %0, %cst {dimension_numbers = #tpu.dot_dimension_numbers<[1], [0], [0], [1], [0, 0, 1, 1], [], []>} : vector<4x4xf32>, vector<4x256xf32>, vector<4x256xf32> -> vector<4x256xf32>
    %c0_3 = arith.constant 0 : index
    %c0_4 = arith.constant 0 : index
    %3 = vector.load %arg3[%c0_3, %c0_4] : memref<4x1xf32, #tpu.memory_space<vmem>>, vector<4x1xf32>
    %4 = vector.broadcast %3 : vector<4x1xf32> to vector<4x256xf32>
    %5 = arith.addf %2, %4 : vector<4x256xf32>
    %cst_5 = arith.constant 0.000000e+00 : f32
    %6 = vector.broadcast %cst_5 : f32 to vector<4x256xf32>
    %7 = arith.maximumf %5, %6 : vector<4x256xf32>
    %c17_i32 = arith.constant 17 : i32
    %8 = tpu.dynamic_rotate %7 by %c17_i32 dim 1 : vector<4x256xf32>, i32 -> vector<4x256xf32>
    %c0_6 = arith.constant 0 : index
    %c0_7 = arith.constant 0 : index
    %c0_8 = arith.constant 0 : index
    %9 = vector.load %arg8[%c0_6, %c0_7, %c0_8] : memref<9x1x256xf32, #tpu.memory_space<vmem>>, vector<1x1x256xf32>
    %10 = vector.shape_cast %9 : vector<1x1x256xf32> to vector<1x256xf32>
    %11 = vector.broadcast %10 : vector<1x256xf32> to vector<4x256xf32>
    %12 = arith.mulf %8, %11 : vector<4x256xf32>
    %c0_9 = arith.constant 0 : index
    %c0_10 = arith.constant 0 : index
    %c0_11 = arith.constant 0 : index
    %13 = vector.load %arg4[%c0_9, %c0_10, %c0_11] : memref<9x4x4xf32, #tpu.memory_space<vmem>>, vector<1x4x4xf32>
    %14 = vector.shape_cast %13 : vector<1x4x4xf32> to vector<4x4xf32>
    %cst_12 = arith.constant dense<0.000000e+00> : vector<4x256xf32>
    %15 = tpu.matmul %14, %12, %cst_12 {dimension_numbers = #tpu.dot_dimension_numbers<[1], [0], [0], [1], [0, 0, 1, 1], [], []>} : vector<4x4xf32>, vector<4x256xf32>, vector<4x256xf32> -> vector<4x256xf32>
    %c16_i32 = arith.constant 16 : i32
    %16 = tpu.dynamic_rotate %7 by %c16_i32 dim 1 : vector<4x256xf32>, i32 -> vector<4x256xf32>
    %c1 = arith.constant 1 : index
    %c0_13 = arith.constant 0 : index
    %c0_14 = arith.constant 0 : index
    %17 = vector.load %arg8[%c1, %c0_13, %c0_14] : memref<9x1x256xf32, #tpu.memory_space<vmem>>, vector<1x1x256xf32>
    %18 = vector.shape_cast %17 : vector<1x1x256xf32> to vector<1x256xf32>
    %19 = vector.broadcast %18 : vector<1x256xf32> to vector<4x256xf32>
    %20 = arith.mulf %16, %19 : vector<4x256xf32>
    %c1_15 = arith.constant 1 : index
    %c0_16 = arith.constant 0 : index
    %c0_17 = arith.constant 0 : index
    %21 = vector.load %arg4[%c1_15, %c0_16, %c0_17] : memref<9x4x4xf32, #tpu.memory_space<vmem>>, vector<1x4x4xf32>
    %22 = vector.shape_cast %21 : vector<1x4x4xf32> to vector<4x4xf32>
    %cst_18 = arith.constant dense<0.000000e+00> : vector<4x256xf32>
    %23 = tpu.matmul %22, %20, %cst_18 {dimension_numbers = #tpu.dot_dimension_numbers<[1], [0], [0], [1], [0, 0, 1, 1], [], []>} : vector<4x4xf32>, vector<4x256xf32>, vector<4x256xf32> -> vector<4x256xf32>
    %24 = arith.addf %15, %23 : vector<4x256xf32>
    %c15_i32 = arith.constant 15 : i32
    %25 = tpu.dynamic_rotate %7 by %c15_i32 dim 1 : vector<4x256xf32>, i32 -> vector<4x256xf32>
    %c2 = arith.constant 2 : index
    %c0_19 = arith.constant 0 : index
    %c0_20 = arith.constant 0 : index
    %26 = vector.load %arg8[%c2, %c0_19, %c0_20] : memref<9x1x256xf32, #tpu.memory_space<vmem>>, vector<1x1x256xf32>
    %27 = vector.shape_cast %26 : vector<1x1x256xf32> to vector<1x256xf32>
    %28 = vector.broadcast %27 : vector<1x256xf32> to vector<4x256xf32>
    %29 = arith.mulf %25, %28 : vector<4x256xf32>
    %c2_21 = arith.constant 2 : index
    %c0_22 = arith.constant 0 : index
    %c0_23 = arith.constant 0 : index
    %30 = vector.load %arg4[%c2_21, %c0_22, %c0_23] : memref<9x4x4xf32, #tpu.memory_space<vmem>>, vector<1x4x4xf32>
    %31 = vector.shape_cast %30 : vector<1x4x4xf32> to vector<4x4xf32>
    %cst_24 = arith.constant dense<0.000000e+00> : vector<4x256xf32>
    %32 = tpu.matmul %31, %29, %cst_24 {dimension_numbers = #tpu.dot_dimension_numbers<[1], [0], [0], [1], [0, 0, 1, 1], [], []>} : vector<4x4xf32>, vector<4x256xf32>, vector<4x256xf32> -> vector<4x256xf32>
    %33 = arith.addf %24, %32 : vector<4x256xf32>
    %c1_i32 = arith.constant 1 : i32
    %34 = tpu.dynamic_rotate %7 by %c1_i32 dim 1 : vector<4x256xf32>, i32 -> vector<4x256xf32>
    %c3 = arith.constant 3 : index
    %c0_25 = arith.constant 0 : index
    %c0_26 = arith.constant 0 : index
    %35 = vector.load %arg8[%c3, %c0_25, %c0_26] : memref<9x1x256xf32, #tpu.memory_space<vmem>>, vector<1x1x256xf32>
    %36 = vector.shape_cast %35 : vector<1x1x256xf32> to vector<1x256xf32>
    %37 = vector.broadcast %36 : vector<1x256xf32> to vector<4x256xf32>
    %38 = arith.mulf %34, %37 : vector<4x256xf32>
    %c3_27 = arith.constant 3 : index
    %c0_28 = arith.constant 0 : index
    %c0_29 = arith.constant 0 : index
    %39 = vector.load %arg4[%c3_27, %c0_28, %c0_29] : memref<9x4x4xf32, #tpu.memory_space<vmem>>, vector<1x4x4xf32>
    %40 = vector.shape_cast %39 : vector<1x4x4xf32> to vector<4x4xf32>
    %cst_30 = arith.constant dense<0.000000e+00> : vector<4x256xf32>
    %41 = tpu.matmul %40, %38, %cst_30 {dimension_numbers = #tpu.dot_dimension_numbers<[1], [0], [0], [1], [0, 0, 1, 1], [], []>} : vector<4x4xf32>, vector<4x256xf32>, vector<4x256xf32> -> vector<4x256xf32>
    %42 = arith.addf %33, %41 : vector<4x256xf32>
    %c4 = arith.constant 4 : index
    %c0_31 = arith.constant 0 : index
    %c0_32 = arith.constant 0 : index
    %43 = vector.load %arg4[%c4, %c0_31, %c0_32] : memref<9x4x4xf32, #tpu.memory_space<vmem>>, vector<1x4x4xf32>
    %44 = vector.shape_cast %43 : vector<1x4x4xf32> to vector<4x4xf32>
    %cst_33 = arith.constant dense<0.000000e+00> : vector<4x256xf32>
    %45 = tpu.matmul %44, %7, %cst_33 {dimension_numbers = #tpu.dot_dimension_numbers<[1], [0], [0], [1], [0, 0, 1, 1], [], []>} : vector<4x4xf32>, vector<4x256xf32>, vector<4x256xf32> -> vector<4x256xf32>
    %46 = arith.addf %42, %45 : vector<4x256xf32>
    %c255_i32 = arith.constant 255 : i32
    %47 = tpu.dynamic_rotate %7 by %c255_i32 dim 1 : vector<4x256xf32>, i32 -> vector<4x256xf32>
    %c5 = arith.constant 5 : index
    %c0_34 = arith.constant 0 : index
    %c0_35 = arith.constant 0 : index
    %48 = vector.load %arg8[%c5, %c0_34, %c0_35] : memref<9x1x256xf32, #tpu.memory_space<vmem>>, vector<1x1x256xf32>
    %49 = vector.shape_cast %48 : vector<1x1x256xf32> to vector<1x256xf32>
    %50 = vector.broadcast %49 : vector<1x256xf32> to vector<4x256xf32>
    %51 = arith.mulf %47, %50 : vector<4x256xf32>
    %c5_36 = arith.constant 5 : index
    %c0_37 = arith.constant 0 : index
    %c0_38 = arith.constant 0 : index
    %52 = vector.load %arg4[%c5_36, %c0_37, %c0_38] : memref<9x4x4xf32, #tpu.memory_space<vmem>>, vector<1x4x4xf32>
    %53 = vector.shape_cast %52 : vector<1x4x4xf32> to vector<4x4xf32>
    %cst_39 = arith.constant dense<0.000000e+00> : vector<4x256xf32>
    %54 = tpu.matmul %53, %51, %cst_39 {dimension_numbers = #tpu.dot_dimension_numbers<[1], [0], [0], [1], [0, 0, 1, 1], [], []>} : vector<4x4xf32>, vector<4x256xf32>, vector<4x256xf32> -> vector<4x256xf32>
    %55 = arith.addf %46, %54 : vector<4x256xf32>
    %c241_i32 = arith.constant 241 : i32
    %56 = tpu.dynamic_rotate %7 by %c241_i32 dim 1 : vector<4x256xf32>, i32 -> vector<4x256xf32>
    %c6 = arith.constant 6 : index
    %c0_40 = arith.constant 0 : index
    %c0_41 = arith.constant 0 : index
    %57 = vector.load %arg8[%c6, %c0_40, %c0_41] : memref<9x1x256xf32, #tpu.memory_space<vmem>>, vector<1x1x256xf32>
    %58 = vector.shape_cast %57 : vector<1x1x256xf32> to vector<1x256xf32>
    %59 = vector.broadcast %58 : vector<1x256xf32> to vector<4x256xf32>
    %60 = arith.mulf %56, %59 : vector<4x256xf32>
    %c6_42 = arith.constant 6 : index
    %c0_43 = arith.constant 0 : index
    %c0_44 = arith.constant 0 : index
    %61 = vector.load %arg4[%c6_42, %c0_43, %c0_44] : memref<9x4x4xf32, #tpu.memory_space<vmem>>, vector<1x4x4xf32>
    %62 = vector.shape_cast %61 : vector<1x4x4xf32> to vector<4x4xf32>
    %cst_45 = arith.constant dense<0.000000e+00> : vector<4x256xf32>
    %63 = tpu.matmul %62, %60, %cst_45 {dimension_numbers = #tpu.dot_dimension_numbers<[1], [0], [0], [1], [0, 0, 1, 1], [], []>} : vector<4x4xf32>, vector<4x256xf32>, vector<4x256xf32> -> vector<4x256xf32>
    %64 = arith.addf %55, %63 : vector<4x256xf32>
    %c240_i32 = arith.constant 240 : i32
    %65 = tpu.dynamic_rotate %7 by %c240_i32 dim 1 : vector<4x256xf32>, i32 -> vector<4x256xf32>
    %c7 = arith.constant 7 : index
    %c0_46 = arith.constant 0 : index
    %c0_47 = arith.constant 0 : index
    %66 = vector.load %arg8[%c7, %c0_46, %c0_47] : memref<9x1x256xf32, #tpu.memory_space<vmem>>, vector<1x1x256xf32>
    %67 = vector.shape_cast %66 : vector<1x1x256xf32> to vector<1x256xf32>
    %68 = vector.broadcast %67 : vector<1x256xf32> to vector<4x256xf32>
    %69 = arith.mulf %65, %68 : vector<4x256xf32>
    %c7_48 = arith.constant 7 : index
    %c0_49 = arith.constant 0 : index
    %c0_50 = arith.constant 0 : index
    %70 = vector.load %arg4[%c7_48, %c0_49, %c0_50] : memref<9x4x4xf32, #tpu.memory_space<vmem>>, vector<1x4x4xf32>
    %71 = vector.shape_cast %70 : vector<1x4x4xf32> to vector<4x4xf32>
    %cst_51 = arith.constant dense<0.000000e+00> : vector<4x256xf32>
    %72 = tpu.matmul %71, %69, %cst_51 {dimension_numbers = #tpu.dot_dimension_numbers<[1], [0], [0], [1], [0, 0, 1, 1], [], []>} : vector<4x4xf32>, vector<4x256xf32>, vector<4x256xf32> -> vector<4x256xf32>
    %73 = arith.addf %64, %72 : vector<4x256xf32>
    %c239_i32 = arith.constant 239 : i32
    %74 = tpu.dynamic_rotate %7 by %c239_i32 dim 1 : vector<4x256xf32>, i32 -> vector<4x256xf32>
    %c8 = arith.constant 8 : index
    %c0_52 = arith.constant 0 : index
    %c0_53 = arith.constant 0 : index
    %75 = vector.load %arg8[%c8, %c0_52, %c0_53] : memref<9x1x256xf32, #tpu.memory_space<vmem>>, vector<1x1x256xf32>
    %76 = vector.shape_cast %75 : vector<1x1x256xf32> to vector<1x256xf32>
    %77 = vector.broadcast %76 : vector<1x256xf32> to vector<4x256xf32>
    %78 = arith.mulf %74, %77 : vector<4x256xf32>
    %c8_54 = arith.constant 8 : index
    %c0_55 = arith.constant 0 : index
    %c0_56 = arith.constant 0 : index
    %79 = vector.load %arg4[%c8_54, %c0_55, %c0_56] : memref<9x4x4xf32, #tpu.memory_space<vmem>>, vector<1x4x4xf32>
    %80 = vector.shape_cast %79 : vector<1x4x4xf32> to vector<4x4xf32>
    %cst_57 = arith.constant dense<0.000000e+00> : vector<4x256xf32>
    %81 = tpu.matmul %80, %78, %cst_57 {dimension_numbers = #tpu.dot_dimension_numbers<[1], [0], [0], [1], [0, 0, 1, 1], [], []>} : vector<4x4xf32>, vector<4x256xf32>, vector<4x256xf32> -> vector<4x256xf32>
    %82 = arith.addf %73, %81 : vector<4x256xf32>
    %c0_58 = arith.constant 0 : index
    %c0_59 = arith.constant 0 : index
    %83 = vector.load %arg5[%c0_58, %c0_59] : memref<4x1xf32, #tpu.memory_space<vmem>>, vector<4x1xf32>
    %84 = vector.broadcast %83 : vector<4x1xf32> to vector<4x256xf32>
    %85 = arith.addf %82, %84 : vector<4x256xf32>
    %cst_60 = arith.constant 0.000000e+00 : f32
    %86 = vector.broadcast %cst_60 : f32 to vector<4x256xf32>
    %87 = arith.maximumf %85, %86 : vector<4x256xf32>
    %c0_61 = arith.constant 0 : index
    %c0_62 = arith.constant 0 : index
    %88 = vector.load %arg6[%c0_61, %c0_62] : memref<4x4xf32, #tpu.memory_space<vmem>>, vector<4x4xf32>
    %cst_63 = arith.constant dense<0.000000e+00> : vector<4x256xf32>
    %89 = tpu.matmul %88, %87, %cst_63 {dimension_numbers = #tpu.dot_dimension_numbers<[1], [0], [0], [1], [0, 0, 1, 1], [], []>} : vector<4x4xf32>, vector<4x256xf32>, vector<4x256xf32> -> vector<4x256xf32>
    %c0_64 = arith.constant 0 : index
    %c0_65 = arith.constant 0 : index
    %90 = vector.load %arg7[%c0_64, %c0_65] : memref<4x1xf32, #tpu.memory_space<vmem>>, vector<4x1xf32>
    %91 = vector.broadcast %90 : vector<4x1xf32> to vector<4x256xf32>
    %92 = arith.addf %89, %91 : vector<4x256xf32>
    %93 = arith.addf %92, %0 : vector<4x256xf32>
    %c0_66 = arith.constant 0 : index
    %c0_67 = arith.constant 0 : index
    %94 = vector.load %arg9[%c0_66, %c0_67] : memref<4x256xf32, #tpu.memory_space<vmem>>, vector<4x256xf32>
    tpu.vector_store %arg9[%c0_66, %c0_67], %93 {strides = array<i32>} : memref<4x256xf32, #tpu.memory_space<vmem>>, vector<4x256xf32>,
    return
  }
  func.func @transform_0(%arg0: i32) -> (i32, i32) {
    %c0_i32 = arith.constant 0 : i32
    %c0_i32_0 = arith.constant 0 : i32
    return %c0_i32, %arg0 : i32, i32
  }
  func.func @transform_1(%arg0: i32) -> (i32, i32) {
    %c0_i32 = arith.constant 0 : i32
    %c0_i32_0 = arith.constant 0 : i32
    %c0_i32_1 = arith.constant 0 : i32
    return %c0_i32, %c0_i32_0 : i32, i32
  }
  func.func @transform_2(%arg0: i32) -> (i32, i32) {
    %c0_i32 = arith.constant 0 : i32
    %c0_i32_0 = arith.constant 0 : i32
    %c0_i32_1 = arith.constant 0 : i32
    return %c0_i32, %c0_i32_0 : i32, i32
  }
  func.func @transform_3(%arg0: i32) -> (i32, i32, i32) {
    %c0_i32 = arith.constant 0 : i32
    %c0_i32_0 = arith.constant 0 : i32
    %c0_i32_1 = arith.constant 0 : i32
    %c0_i32_2 = arith.constant 0 : i32
    return %c0_i32, %c0_i32_0, %c0_i32_1 : i32, i32, i32
  }
  func.func @transform_4(%arg0: i32) -> (i32, i32) {
    %c0_i32 = arith.constant 0 : i32
    %c0_i32_0 = arith.constant 0 : i32
    %c0_i32_1 = arith.constant 0 : i32
    return %c0_i32, %c0_i32_0 : i32, i32
  }
  func.func @transform_5(%arg0: i32) -> (i32, i32) {
    %c0_i32 = arith.constant 0 : i32
    %c0_i32_0 = arith.constant 0 : i32
    %c0_i32_1 = arith.constant 0 : i32
    return %c0_i32, %c0_i32_0 : i32, i32
  }
  func.func @transform_6(%arg0: i32) -> (i32, i32) {
    %c0_i32 = arith.constant 0 : i32
    %c0_i32_0 = arith.constant 0 : i32
    %c0_i32_1 = arith.constant 0 : i32
    return %c0_i32, %c0_i32_0 : i32, i32
  }
  func.func @transform_7(%arg0: i32) -> (i32, i32, i32) {
    %c0_i32 = arith.constant 0 : i32
    %c0_i32_0 = arith.constant 0 : i32
    %c0_i32_1 = arith.constant 0 : i32
    %c0_i32_2 = arith.constant 0 : i32
    return %c0_i32, %c0_i32_0, %c0_i32_1 : i32, i32, i32
  }
  func.func @transform_8(%arg0: i32) -> (i32, i32) {
    %c0_i32 = arith.constant 0 : i32
    %c0_i32_0 = arith.constant 0 : i32
    return %c0_i32, %arg0 : i32, i32
  }
}

</mosaic_0001>

<llo_original>
// kernel: tpu_custom_call.1
$region0: #{tpu_custom_call.1}
  #allocation0 [shape = 'u32[]', space=smem, size = 0x4, offset = 0x4, fixed_abs, tag = 'smem constant byte address 0x4 - core index']
  #allocation1 [shape = 'u32[144,128]{1,0:T(1,128)}', space=vmem, size = 0x12000, scoped, tag = 'internal scratch']
  %s0 = inlined_call_operand.vmem [shape: f32[4,512], index: 0, kind: input, shape index: {}]
  %s1 = inlined_call_operand.vmem [shape: f32[4,4], index: 1, kind: input, shape index: {}]
  %s2 = inlined_call_operand.vmem [shape: f32[4,1], index: 2, kind: input, shape index: {}]
  %s3 = inlined_call_operand.vmem [shape: f32[9,4,4], index: 3, kind: input, shape index: {}]
  %s4 = inlined_call_operand.vmem [shape: f32[4,1], index: 4, kind: input, shape index: {}]
  %s5 = inlined_call_operand.vmem [shape: f32[4,4], index: 5, kind: input, shape index: {}]
  %s6 = inlined_call_operand.vmem [shape: f32[4,1], index: 6, kind: input, shape index: {}]
  %s7 = inlined_call_operand.vmem [shape: f32[9,1,256], index: 7, kind: input, shape index: {}]
  %s8 = inlined_call_operand.hbm [shape: f32[4,512], index: 8, kind: output, shape index: {}]
  %s9 = sld [smem:[#allocation0]]
  $region65: #{tpu_custom_call.1} parent=0
    _
  %s11 = ssub.s32 1, %s9
  %s12 = scalar_select 0, %s11, %s9
  $region1: #{tpu_custom_call.1} parent=0
    #allocation2 [shape = 'u8[8192]{0}', space=vmem, size = 0x2000, scoped, tag = 'output window, operand 0']
    #allocation3 [shape = 's32[2]{0}', space=sflag, size = 0x8, scoped, tag = 'scoped memory for tpu_custom_call.1']
    %13 = vsyncpa [#allocation3], 0
    %s14 = scalar_lea.sflag [#allocation3], 1
    %15 = vsyncpa %s14, 0
    loop: start=0, step=1, limit=4
    $region2: #{tpu_custom_call.1} parent=1 // loop_pre_header
      _
    $region3: #{tpu_custom_call.1} parent=1 // loop_header
      %s17 = sphi 0, %s21
      %p18 = scmp.ge.s32.totalorder %s17, 4
      %s27 = sphi 0, %s29
      %s30 = sphi 0, %s27
      %s31 = sphi 0, %s30
      %s47 = sphi 0, %s31
      %s51 = sphi 0, %s51
      %s53 = sphi 0, %s51
      %s54 = sphi 0, %s53
      %s68 = sphi 0, %s54
      %s72 = sphi 0, %s72
      %s74 = sphi 0, %s72
      %s75 = sphi 0, %s74
      %s89 = sphi 0, %s75
      %s93 = sphi 0, %s93
      %s95 = sphi 0, %s93
      %s96 = sphi 0, %s95
      %s110 = sphi 0, %s96
      %s114 = sphi 0, %s114
      %s116 = sphi 0, %s114
      %s117 = sphi 0, %s116
      %s131 = sphi 0, %s117
      %s135 = sphi 0, %s135
      %s137 = sphi 0, %s135
      %s138 = sphi 0, %s137
      %s152 = sphi 0, %s138
      %s156 = sphi 0, %s156
      %s158 = sphi 0, %s156
      %s159 = sphi 0, %s158
      %s173 = sphi 0, %s159
      %s177 = sphi 0, %s177
      %s179 = sphi 0, %s177
      %s180 = sphi 0, %s179
      %s194 = sphi 0, %s180
      %s200 = sphi 0, %s202
      %s203 = sphi 0, %s200
      %s204 = sphi 0, %s203
      %s220 = sphi 0, %s204
    $region4: #{tpu_custom_call.1} parent=1 // loop_header_branch
      %20 = sbr.rel (%p18) target = $region8
    $region5: #{tpu_custom_call.1} parent=1 // loop_body
      %s22 = ssub.s32 %s17, 1
      %s23 = ssub.s32 %s17, 2
      %s24 = sadd.s32 %s17, 1
      %s25 = ssub.s32 %s17, %s24
      %p26 = scmp.eq.s32.totalorder %s25, 0
      %s28 = sadd.s32 %s27, 1
      %s29 = scalar_select %p26, %s27, %s28
      %p32 = pneg %p26
      %p33 = scmp.eq.s32.totalorder %s17, 1
      %p34 = por %p32, %p33
      %p35 = scmp.ne.s32.totalorder %s27, %s30
      %p36 = scmp.eq.s32.totalorder %s17, 0
      %p37 = por %p35, %p36
      %p38 = scmp.ne.s32.totalorder %s27, %s30
      %p39 = scmp.eq.s32.totalorder %s22, 1
      %p40 = por %p38, %p39
      %p41 = scmp.ne.s32.totalorder %s30, %s31
      %p42 = scmp.eq.s32.totalorder %s22, 0
      %p43 = por %p41, %p42
      %p44 = scmp.ne.s32.totalorder %s30, %s31
      %p45 = scmp.eq.s32.totalorder %s23, 1
      %p46 = por %p44, %p45
      %p48 = scmp.ne.s32.totalorder %s31, %s47
      %p49 = scmp.eq.s32.totalorder %s23, 0
      %p50 = por %p48, %p49
      %s52 = sadd.s32 %s51, 1
      %p55 = scmp.eq.s32.totalorder %s17, 1
      %p56 = scmp.ne.s32.totalorder %s51, %s53
      %p57 = scmp.eq.s32.totalorder %s17, 0
      %p58 = por %p56, %p57
      %p59 = scmp.ne.s32.totalorder %s51, %s53
      %p60 = scmp.eq.s32.totalorder %s22, 1
      %p61 = por %p59, %p60
      %p62 = scmp.ne.s32.totalorder %s53, %s54
      %p63 = scmp.eq.s32.totalorder %s22, 0
      %p64 = por %p62, %p63
      %p65 = scmp.ne.s32.totalorder %s53, %s54
      %p66 = scmp.eq.s32.totalorder %s23, 1
      %p67 = por %p65, %p66
      %p69 = scmp.ne.s32.totalorder %s54, %s68
      %p70 = scmp.eq.s32.totalorder %s23, 0
      %p71 = por %p69, %p70
      %s73 = sadd.s32 %s72, 1
      %p76 = scmp.eq.s32.totalorder %s17, 1
      %p77 = scmp.ne.s32.totalorder %s72, %s74
      %p78 = scmp.eq.s32.totalorder %s17, 0
      %p79 = por %p77, %p78
      %p80 = scmp.ne.s32.totalorder %s72, %s74
      %p81 = scmp.eq.s32.totalorder %s22, 1
      %p82 = por %p80, %p81
      %p83 = scmp.ne.s32.totalorder %s74, %s75
      %p84 = scmp.eq.s32.totalorder %s22, 0
      %p85 = por %p83, %p84
      %p86 = scmp.ne.s32.totalorder %s74, %s75
      %p87 = scmp.eq.s32.totalorder %s23, 1
      %p88 = por %p86, %p87
      %p90 = scmp.ne.s32.totalorder %s75, %s89
      %p91 = scmp.eq.s32.totalorder %s23, 0
      %p92 = por %p90, %p91
      %s94 = sadd.s32 %s93, 1
      %p97 = scmp.eq.s32.totalorder %s17, 1
      %p98 = scmp.ne.s32.totalorder %s93, %s95
      %p99 = scmp.eq.s32.totalorder %s17, 0
      %p100 = por %p98, %p99
      %p101 = scmp.ne.s32.totalorder %s93, %s95
      %p102 = scmp.eq.s32.totalorder %s22, 1
      %p103 = por %p101, %p102
      %p104 = scmp.ne.s32.totalorder %s95, %s96
      %p105 = scmp.eq.s32.totalorder %s22, 0
      %p106 = por %p104, %p105
      %p107 = scmp.ne.s32.totalorder %s95, %s96
      %p108 = scmp.eq.s32.totalorder %s23, 1
      %p109 = por %p107, %p108
      %p111 = scmp.ne.s32.totalorder %s96, %s110
      %p112 = scmp.eq.s32.totalorder %s23, 0
      %p113 = por %p111, %p112
      %s115 = sadd.s32 %s114, 1
      %p118 = scmp.eq.s32.totalorder %s17, 1
      %p119 = scmp.ne.s32.totalorder %s114, %s116
      %p120 = scmp.eq.s32.totalorder %s17, 0
      %p121 = por %p119, %p120
      %p122 = scmp.ne.s32.totalorder %s114, %s116
      %p123 = scmp.eq.s32.totalorder %s22, 1
      %p124 = por %p122, %p123
      %p125 = scmp.ne.s32.totalorder %s116, %s117
      %p126 = scmp.eq.s32.totalorder %s22, 0
      %p127 = por %p125, %p126
      %p128 = scmp.ne.s32.totalorder %s116, %s117
      %p129 = scmp.eq.s32.totalorder %s23, 1
      %p130 = por %p128, %p129
      %p132 = scmp.ne.s32.totalorder %s117, %s131
      %p133 = scmp.eq.s32.totalorder %s23, 0
      %p134 = por %p132, %p133
      %s136 = sadd.s32 %s135, 1
      %p139 = scmp.eq.s32.totalorder %s17, 1
      %p140 = scmp.ne.s32.totalorder %s135, %s137
      %p141 = scmp.eq.s32.totalorder %s17, 0
      %p142 = por %p140, %p141
      %p143 = scmp.ne.s32.totalorder %s135, %s137
      %p144 = scmp.eq.s32.totalorder %s22, 1
      %p145 = por %p143, %p144
      %p146 = scmp.ne.s32.totalorder %s137, %s138
      %p147 = scmp.eq.s32.totalorder %s22, 0
      %p148 = por %p146, %p147
      %p149 = scmp.ne.s32.totalorder %s137, %s138
      %p150 = scmp.eq.s32.totalorder %s23, 1
      %p151 = por %p149, %p150
      %p153 = scmp.ne.s32.totalorder %s138, %s152
      %p154 = scmp.eq.s32.totalorder %s23, 0
      %p155 = por %p153, %p154
      %s157 = sadd.s32 %s156, 1
      %p160 = scmp.eq.s32.totalorder %s17, 1
      %p161 = scmp.ne.s32.totalorder %s156, %s158
      %p162 = scmp.eq.s32.totalorder %s17, 0
      %p163 = por %p161, %p162
      %p164 = scmp.ne.s32.totalorder %s156, %s158
      %p165 = scmp.eq.s32.totalorder %s22, 1
      %p166 = por %p164, %p165
      %p167 = scmp.ne.s32.totalorder %s158, %s159
      %p168 = scmp.eq.s32.totalorder %s22, 0
      %p169 = por %p167, %p168
      %p170 = scmp.ne.s32.totalorder %s158, %s159
      %p171 = scmp.eq.s32.totalorder %s23, 1
      %p172 = por %p170, %p171
      %p174 = scmp.ne.s32.totalorder %s159, %s173
      %p175 = scmp.eq.s32.totalorder %s23, 0
      %p176 = por %p174, %p175
      %s178 = sadd.s32 %s177, 1
      %p181 = scmp.eq.s32.totalorder %s17, 1
      %p182 = scmp.ne.s32.totalorder %s177, %s179
      %p183 = scmp.eq.s32.totalorder %s17, 0
      %p184 = por %p182, %p183
      %p185 = scmp.ne.s32.totalorder %s177, %s179
      %p186 = scmp.eq.s32.totalorder %s22, 1
      %p187 = por %p185, %p186
      %p188 = scmp.ne.s32.totalorder %s179, %s180
      %p189 = scmp.eq.s32.totalorder %s22, 0
      %p190 = por %p188, %p189
      %p191 = scmp.ne.s32.totalorder %s179, %s180
      %p192 = scmp.eq.s32.totalorder %s23, 1
      %p193 = por %p191, %p192
      %p195 = scmp.ne.s32.totalorder %s180, %s194
      %p196 = scmp.eq.s32.totalorder %s23, 0
      %p197 = por %p195, %p196
      %s198 = ssub.s32 %s17, %s24
      %p199 = scmp.eq.s32.totalorder %s198, 0
      %s201 = sadd.s32 %s200, 1
      %s202 = scalar_select %p199, %s200, %s201
      %p205 = pneg %p199
      %p206 = scmp.eq.s32.totalorder %s17, 1
      %p207 = por %p205, %p206
      %p208 = scmp.ne.s32.totalorder %s200, %s203
      %p209 = scmp.eq.s32.totalorder %s17, 0
      %p210 = por %p208, %p209
      %p211 = scmp.ne.s32.totalorder %s200, %s203
      %p212 = scmp.eq.s32.totalorder %s22, 1
      %p213 = por %p211, %p212
      %p214 = scmp.ne.s32.totalorder %s203, %s204
      %p215 = scmp.eq.s32.totalorder %s22, 0
      %p216 = por %p214, %p215
      %p217 = scmp.ne.s32.totalorder %s203, %s204
      %p218 = scmp.eq.s32.totalorder %s23, 1
      %p219 = por %p217, %p218
      %p221 = scmp.ne.s32.totalorder %s204, %s220
      %p222 = scmp.eq.s32.totalorder %s23, 0
      %p223 = por %p221, %p222
      %p224 = scmp.le.s32.totalorder 1, %s17
      %p225 = scmp.lt.s32.totalorder %s17, 3
      %p226 = pnand %p224, %p225
      %p227 = pneg %p226
      // Predicated region
      $region9: #{tpu_custom_call.1} parent=5 // pred_check
        _
      $region10: #{tpu_custom_call.1} parent=5 // pred_check_branch
        %229 = sbr.rel (%p226) target = $region12
      $region11: #{tpu_custom_call.1} parent=5 // pred_region
        %s230 = ssub.s32 %s17, 1
        // Predicated region
        $region13: #{tpu_custom_call.1} parent=11 // pred_check
          %p231 = pneg %p64
        $region14: #{tpu_custom_call.1} parent=11 // pred_check_branch
          %233 = sbr.rel (%p231) target = $region16
        $region15: #{tpu_custom_call.1} parent=11 // pred_region
          _
        $region16: #{tpu_custom_call.1} parent=11 // pred_fallthru
          _
        // Predicated region
        $region17: #{tpu_custom_call.1} parent=11 // pred_check
          %p234 = pneg %p85
        $region18: #{tpu_custom_call.1} parent=11 // pred_check_branch
          %236 = sbr.rel (%p234) target = $region20
        $region19: #{tpu_custom_call.1} parent=11 // pred_region
          _
        $region20: #{tpu_custom_call.1} parent=11 // pred_fallthru
          _
        // Predicated region
        $region21: #{tpu_custom_call.1} parent=11 // pred_check
          %p237 = pneg %p106
        $region22: #{tpu_custom_call.1} parent=11 // pred_check_branch
          %239 = sbr.rel (%p237) target = $region24
        $region23: #{tpu_custom_call.1} parent=11 // pred_region
          _
        $region24: #{tpu_custom_call.1} parent=11 // pred_fallthru
          _
        // Predicated region
        $region25: #{tpu_custom_call.1} parent=11 // pred_check
          %p240 = pneg %p127
        $region26: #{tpu_custom_call.1} parent=11 // pred_check_branch
          %242 = sbr.rel (%p240) target = $region28
        $region27: #{tpu_custom_call.1} parent=11 // pred_region
          _
        $region28: #{tpu_custom_call.1} parent=11 // pred_fallthru
          _
        // Predicated region
        $region29: #{tpu_custom_call.1} parent=11 // pred_check
          %p243 = pneg %p148
        $region30: #{tpu_custom_call.1} parent=11 // pred_check_branch
          %245 = sbr.rel (%p243) target = $region32
        $region31: #{tpu_custom_call.1} parent=11 // pred_region
          _
        $region32: #{tpu_custom_call.1} parent=11 // pred_fallthru
          _
        // Predicated region
        $region33: #{tpu_custom_call.1} parent=11 // pred_check
          %p246 = pneg %p169
        $region34: #{tpu_custom_call.1} parent=11 // pred_check_branch
          %248 = sbr.rel (%p246) target = $region36
        $region35: #{tpu_custom_call.1} parent=11 // pred_region
          _
        $region36: #{tpu_custom_call.1} parent=11 // pred_fallthru
          _
        // Predicated region
        $region37: #{tpu_custom_call.1} parent=11 // pred_check
          %p249 = pneg %p190
        $region38: #{tpu_custom_call.1} parent=11 // pred_check_branch
          %251 = sbr.rel (%p249) target = $region40
        $region39: #{tpu_custom_call.1} parent=11 // pred_region
          _
        $region40: #{tpu_custom_call.1} parent=11 // pred_fallthru
          _
      $region12: #{tpu_custom_call.1} parent=5 // pred_fallthru
        _
      %p252 = scmp.lt.s32.totalorder %s17, 2
      // Predicated region
      $region41: #{tpu_custom_call.1} parent=5 // pred_check
        %p253 = pneg %p252
      $region42: #{tpu_custom_call.1} parent=5 // pred_check_branch
        %255 = sbr.rel (%p253) target = $region44
      $region43: #{tpu_custom_call.1} parent=5 // pred_region
        // Predicated region
        $region45: #{tpu_custom_call.1} parent=43 // pred_check
          %p256 = pneg %p37
        $region46: #{tpu_custom_call.1} parent=43 // pred_check_branch
          %258 = sbr.rel (%p256) target = $region48
        $region47: #{tpu_custom_call.1} parent=43 // pred_region
          %s259 = smul.u32 2, %s17
          %p260 = scmp.lt.s32.totalorder %s259, 3
          %s261 = scalar_select %p260, %s259, 3
          %s262 = smul.addr %s261, 4
          %s263 = scalar_lea.vmem %s0, %s262
          %s264 = smul.u32 2, %s17
        $region48: #{tpu_custom_call.1} parent=43 // pred_fallthru
          _
      $region44: #{tpu_custom_call.1} parent=5 // pred_fallthru
        _
      %p265 = scmp.le.s32.totalorder 1, %s17
      %p266 = scmp.lt.s32.totalorder %s17, 3
      %p267 = pnand %p265, %p266
      %p268 = pneg %p267
      // Predicated region
      $region49: #{tpu_custom_call.1} parent=5 // pred_check
        _
      $region50: #{tpu_custom_call.1} parent=5 // pred_check_branch
        %270 = sbr.rel (%p267) target = $region52
      $region51: #{tpu_custom_call.1} parent=5 // pred_region
        %s271 = ssub.s32 %s17, 1
        %s272 = smul.u32 2, %s22
        %p273 = scmp.lt.s32.totalorder %s272, 3
        %s274 = scalar_select %p273, %s272, 3
        %s275 = smul.addr %s274, 4
        %s276 = scalar_lea.vmem %s0, %s275
        %p277 = pneg %p43
        %p278 = pneg %p40
        %p279 = pneg %p64
        %p280 = pneg %p61
        %p281 = pneg %p85
        %p282 = pneg %p82
        %p283 = pneg %p106
        %p284 = pneg %p103
        %p285 = pneg %p127
        %p286 = pneg %p124
        %p287 = pneg %p148
        %p288 = pneg %p145
        %p289 = pneg %p169
        %p290 = pneg %p166
        %p291 = pneg %p190
        %p292 = pneg %p187
        %p293 = pneg %p216
        %p294 = pneg %p213
        %s295 = sand.u32 %s203, 1
        %s296 = scalar_lea.sflag [#allocation3], %s295
        %s297 = sand.u32 %s203, 1
        %s298 = smul.addr %s297, 8
        %s299 = scalar_lea.vmem [#allocation2], %s298
        %s300 = smul.u32 2, %s22
        %p301 = scmp.lt.s32.totalorder %s300, 3
        %s302 = scalar_select %p301, %s300, 3
        %s303 = smul.addr %s302, 4
        %s304 = scalar_lea.vmem %s0, %s303
        %s305 = smul.u32 2, %s22
        %s306 = smul.u32 2, %s22
        %v307 = vld [vmem:[%s304] sm:$0xff]
        %v308 = vld [vmem:[%s1] sm:$0xf]
        %v309 = vld [vmem:[%s2] sm:$0xf]
        %311 = vset.pattern.permute.xlu0 0
        %312 = vperm.xlu0 %311, %v309
        %v313 = vpop.permute.xlu0 %312
        %v316 = vcombine.high %v307, %v307
        %vm317 = vcmask 31744
        %v319 = vsel %vm317, %v308, 0
        %vm321 = vcmask 1043456
        %v322 = vsel %vm321, %v307, 0
        %v324 = vsel %vm321, %v316, 0
        %326 = vmatprep.subr.mxu0 0.0
        %327 = vmatpush1.msra.mxu0 0.0
        %328 = vmatprep.subr.mxu0 0.0
        %329 = vmatpush1.msra.mxu0 0.0
        %330 = vmatprep.subr.mxu0 0.0
        %331 = vmatpush1.msra.mxu0 0.0
        %332 = vmatprep.subr.mxu0 0.0
        %333 = vmatpush1.msra.mxu0 0.0
        %334 = vmatprep.subr.mxu0 0.0
        %335 = vmatpush1.msra.mxu0 0.0
        %336 = vmatprep.subr.mxu0 0.0
        %337 = vmatpush1.msra.mxu0 0.0
        %338 = vmatprep.subr.mxu0 0.0
        %339 = vmatpush1.msra.mxu0 0.0
        %340 = vmatprep.subr.mxu0 0.0
        %341 = vmatpush1.msra.mxu0 0.0
        %342 = vmatprep.subr.mxu0 0.0
        %343 = vmatpush1.msra.mxu0 0.0
        %344 = vmatprep.subr.mxu0 0.0
        %345 = vmatpush1.msra.mxu0 0.0
        %346 = vmatprep.subr.mxu0 0.0
        %347 = vmatpush1.msra.mxu0 0.0
        %348 = vmatprep.subr.mxu0 0.0
        %349 = vmatpush1.msra.mxu0 0.0
        %350 = vmatprep.subr.mxu0 0.0
        %351 = vmatpush1.msra.mxu0 0.0
        %352 = vmatprep.subr.mxu0 0.0
        %353 = vmatpush1.msra.mxu0 0.0
        %354 = vmatprep.subr.mxu0 0.0
        %355 = vmatpush1.msra.mxu0 0.0
        %356 = vmatprep.subr.mxu0 %v324
        %357 = vmatpush1.msra.mxu0 %v322
        %358 = vmatprep.subr.mxu0 0.0
        %359 = vmatpush2.msra.mxu0 0.0
        %360 = vmatprep.subr.mxu0 0.0
        %361 = vmatpush2.msra.mxu0 0.0
        %362 = vmatprep.subr.mxu0 0.0
        %363 = vmatpush2.msra.mxu0 0.0
        %364 = vmatprep.subr.mxu0 0.0
        %365 = vmatpush2.msra.mxu0 0.0
        %366 = vmatprep.subr.mxu0 0.0
        %367 = vmatpush2.msra.mxu0 0.0
        %368 = vmatprep.subr.mxu0 0.0
        %369 = vmatpush2.msra.mxu0 0.0
        %370 = vmatprep.subr.mxu0 0.0
        %371 = vmatpush2.msra.mxu0 0.0
        %372 = vmatprep.subr.mxu0 0.0
        %373 = vmatpush2.msra.mxu0 0.0
        %374 = vmatprep.subr.mxu0 0.0
        %375 = vmatpush2.msra.mxu0 0.0
        %376 = vmatprep.subr.mxu0 0.0
        %377 = vmatpush2.msra.mxu0 0.0
        %378 = vmatprep.subr.mxu0 0.0
        %379 = vmatpush2.msra.mxu0 0.0
        %380 = vmatprep.subr.mxu0 0.0
        %381 = vmatpush2.msra.mxu0 0.0
        %382 = vmatprep.subr.mxu0 0.0
        %383 = vmatpush2.msra.mxu0 0.0
        %384 = vmatprep.subr.mxu0 0.0
        %385 = vmatpush2.msra.mxu0 0.0
        %386 = vmatprep.subr.mxu0 0.0
        %387 = vmatpush2.msra.mxu0 0.0
        %388 = vmatprep.subr.mxu0 0.0
        %389 = vmatpush2.msra.mxu0 0.0
        %390 = vmatprep.mubr.f32.mxu0 0.0
        %391 = vmatmul.mubr.f32.gmra.mxu0 %v319
        %v392 = vpop.f32.mrf.mxu0
        %v393 = vadd.f32 %v313, %v392
        %v394 = vpop.f32.mrf.mxu0
        %v395 = vadd.f32 %v313, %v394
        %396 = vdwg.mxu0
        %v397 = vmax.f32 %v393, 0.0
        %v398 = vmax.f32 %v395, 0.0
        %399 = vrot.lane.b32.xlu0 %v397, 17
        %v400 = vpop.permute.xlu0 %399
        %401 = vrot.lane.b32.xlu0 %v398, 17
        %v402 = vpop.permute.xlu0 %401
        %v403 = vlaneseq
        %v404 = vand.u32 %v403, 127
        %vm405 = vcmp.lt.s32.totalorder %v404, 17
        %v406 = vsel %vm405, %v400, %v402
        %v407 = vsel %vm405, %v402, %v400
        %v408 = vld [vmem:[%s7] sm:$0x3]
        %v410 = vlaneseq
        %v411 = vshrl.u32 %v410, 7
        %v412 = vsub.s32 0, %v411
        %v413 = vrot.slane %v408, %v412
        %v414 = vlaneseq
        %v415 = vshrl.u32 %v414, 7
        %v416 = vsub.s32 1, %v415
        %v417 = vrot.slane %v408, %v416
        %v420 = vmul.f32 %v407, %v413
        %v421 = vmul.f32 %v406, %v417
        %v422 = vld [vmem:[%s3] sm:$0xf]
        %423 = vrot.lane.b32.xlu0 %v397, 16
        %v424 = vpop.permute.xlu0 %423
        %425 = vrot.lane.b32.xlu0 %v398, 16
        %v426 = vpop.permute.xlu0 %425
        %vm427 = vcmp.lt.s32.totalorder %v404, 16
        %v428 = vsel %vm427, %v424, %v426
        %v429 = vsel %vm427, %v426, %v424
        %s430 = scalar_lea.vmem %s7, 2
        %v431 = vld [vmem:[%s430] sm:$0x3]
        %v433 = vlaneseq
        %v434 = vshrl.u32 %v433, 7
        %v435 = vsub.s32 0, %v434
        %v436 = vrot.slane %v431, %v435
        %v437 = vlaneseq
        %v438 = vshrl.u32 %v437, 7
        %v439 = vsub.s32 1, %v438
        %v440 = vrot.slane %v431, %v439
        %v443 = vmul.f32 %v429, %v436
        %v444 = vmul.f32 %v428, %v440
        %s445 = scalar_lea.vmem %s3, 4
        %v446 = vld [vmem:[%s445] sm:$0xf]
        %v448 = vsel %vm317, %v446, 0
        %v451 = vsel %vm321, %v443, 0
        %v454 = vsel %vm321, %v444, 0
        %456 = vmatprep.subr.mxu0 0.0
        %457 = vmatpush1.msra.mxu0 0.0
        %458 = vmatprep.subr.mxu0 0.0
        %459 = vmatpush1.msra.mxu0 0.0
        %460 = vmatprep.subr.mxu0 0.0
        %461 = vmatpush1.msra.mxu0 0.0
        %462 = vmatprep.subr.mxu0 0.0
        %463 = vmatpush1.msra.mxu0 0.0
        %464 = vmatprep.subr.mxu0 0.0
        %465 = vmatpush1.msra.mxu0 0.0
        %466 = vmatprep.subr.mxu0 0.0
        %467 = vmatpush1.msra.mxu0 0.0
        %468 = vmatprep.subr.mxu0 0.0
        %469 = vmatpush1.msra.mxu0 0.0
        %470 = vmatprep.subr.mxu0 0.0
        %471 = vmatpush1.msra.mxu0 0.0
        %472 = vmatprep.subr.mxu0 0.0
        %473 = vmatpush1.msra.mxu0 0.0
        %474 = vmatprep.subr.mxu0 0.0
        %475 = vmatpush1.msra.mxu0 0.0
        %476 = vmatprep.subr.mxu0 0.0
        %477 = vmatpush1.msra.mxu0 0.0
        %478 = vmatprep.subr.mxu0 0.0
        %479 = vmatpush1.msra.mxu0 0.0
        %480 = vmatprep.subr.mxu0 0.0
        %481 = vmatpush1.msra.mxu0 0.0
        %482 = vmatprep.subr.mxu0 0.0
        %483 = vmatpush1.msra.mxu0 0.0
        %484 = vmatprep.subr.mxu0 0.0
        %485 = vmatpush1.msra.mxu0 0.0
        %486 = vmatprep.subr.mxu0 %v454
        %487 = vmatpush1.msra.mxu0 %v451
        %488 = vmatprep.subr.mxu0 0.0
        %489 = vmatpush2.msra.mxu0 0.0
        %490 = vmatprep.subr.mxu0 0.0
        %491 = vmatpush2.msra.mxu0 0.0
        %492 = vmatprep.subr.mxu0 0.0
        %493 = vmatpush2.msra.mxu0 0.0
        %494 = vmatprep.subr.mxu0 0.0
        %495 = vmatpush2.msra.mxu0 0.0
        %496 = vmatprep.subr.mxu0 0.0
        %497 = vmatpush2.msra.mxu0 0.0
        %498 = vmatprep.subr.mxu0 0.0
        %499 = vmatpush2.msra.mxu0 0.0
        %500 = vmatprep.subr.mxu0 0.0
        %501 = vmatpush2.msra.mxu0 0.0
        %502 = vmatprep.subr.mxu0 0.0
        %503 = vmatpush2.msra.mxu0 0.0
        %504 = vmatprep.subr.mxu0 0.0
        %505 = vmatpush2.msra.mxu0 0.0
        %506 = vmatprep.subr.mxu0 0.0
        %507 = vmatpush2.msra.mxu0 0.0
        %508 = vmatprep.subr.mxu0 0.0
        %509 = vmatpush2.msra.mxu0 0.0
        %510 = vmatprep.subr.mxu0 0.0
        %511 = vmatpush2.msra.mxu0 0.0
        %512 = vmatprep.subr.mxu0 0.0
        %513 = vmatpush2.msra.mxu0 0.0
        %514 = vmatprep.subr.mxu0 0.0
        %515 = vmatpush2.msra.mxu0 0.0
        %516 = vmatprep.subr.mxu0 0.0
        %517 = vmatpush2.msra.mxu0 0.0
        %518 = vmatprep.subr.mxu0 0.0
        %519 = vmatpush2.msra.mxu0 0.0
        %520 = vmatprep.mubr.f32.mxu0 0.0
        %521 = vmatmul.mubr.f32.gmra.mxu0 %v448
        %v522 = vpop.f32.mrf.mxu0
        %v523 = vadd.f32 0.0, %v522
        %v524 = vpop.f32.mrf.mxu0
        %v525 = vadd.f32 0.0, %v524
        %526 = vdwg.mxu0
        %v528 = vsel %vm317, %v422, 0
        %v531 = vsel %vm321, %v420, 0
        %v534 = vsel %vm321, %v421, 0
        %536 = vmatprep.subr.mxu0 0.0
        %537 = vmatpush1.msra.mxu0 0.0
        %538 = vmatprep.subr.mxu0 0.0
        %539 = vmatpush1.msra.mxu0 0.0
        %540 = vmatprep.subr.mxu0 0.0
        %541 = vmatpush1.msra.mxu0 0.0
        %542 = vmatprep.subr.mxu0 0.0
        %543 = vmatpush1.msra.mxu0 0.0
        %544 = vmatprep.subr.mxu0 0.0
        %545 = vmatpush1.msra.mxu0 0.0
        %546 = vmatprep.subr.mxu0 0.0
        %547 = vmatpush1.msra.mxu0 0.0
        %548 = vmatprep.subr.mxu0 0.0
        %549 = vmatpush1.msra.mxu0 0.0
        %550 = vmatprep.subr.mxu0 0.0
        %551 = vmatpush1.msra.mxu0 0.0
        %552 = vmatprep.subr.mxu0 0.0
        %553 = vmatpush1.msra.mxu0 0.0
        %554 = vmatprep.subr.mxu0 0.0
        %555 = vmatpush1.msra.mxu0 0.0
        %556 = vmatprep.subr.mxu0 0.0
        %557 = vmatpush1.msra.mxu0 0.0
        %558 = vmatprep.subr.mxu0 0.0
        %559 = vmatpush1.msra.mxu0 0.0
        %560 = vmatprep.subr.mxu0 0.0
        %561 = vmatpush1.msra.mxu0 0.0
        %562 = vmatprep.subr.mxu0 0.0
        %563 = vmatpush1.msra.mxu0 0.0
        %564 = vmatprep.subr.mxu0 0.0
        %565 = vmatpush1.msra.mxu0 0.0
        %566 = vmatprep.subr.mxu0 %v534
        %567 = vmatpush1.msra.mxu0 %v531
        %568 = vmatprep.subr.mxu0 0.0
        %569 = vmatpush2.msra.mxu0 0.0
        %570 = vmatprep.subr.mxu0 0.0
        %571 = vmatpush2.msra.mxu0 0.0
        %572 = vmatprep.subr.mxu0 0.0
        %573 = vmatpush2.msra.mxu0 0.0
        %574 = vmatprep.subr.mxu0 0.0
        %575 = vmatpush2.msra.mxu0 0.0
        %576 = vmatprep.subr.mxu0 0.0
        %577 = vmatpush2.msra.mxu0 0.0
        %578 = vmatprep.subr.mxu0 0.0
        %579 = vmatpush2.msra.mxu0 0.0
        %580 = vmatprep.subr.mxu0 0.0
        %581 = vmatpush2.msra.mxu0 0.0
        %582 = vmatprep.subr.mxu0 0.0
        %583 = vmatpush2.msra.mxu0 0.0
        %584 = vmatprep.subr.mxu0 0.0
        %585 = vmatpush2.msra.mxu0 0.0
        %586 = vmatprep.subr.mxu0 0.0
        %587 = vmatpush2.msra.mxu0 0.0
        %588 = vmatprep.subr.mxu0 0.0
        %589 = vmatpush2.msra.mxu0 0.0
        %590 = vmatprep.subr.mxu0 0.0
        %591 = vmatpush2.msra.mxu0 0.0
        %592 = vmatprep.subr.mxu0 0.0
        %593 = vmatpush2.msra.mxu0 0.0
        %594 = vmatprep.subr.mxu0 0.0
        %595 = vmatpush2.msra.mxu0 0.0
        %596 = vmatprep.subr.mxu0 0.0
        %597 = vmatpush2.msra.mxu0 0.0
        %598 = vmatprep.subr.mxu0 0.0
        %599 = vmatpush2.msra.mxu0 0.0
        %600 = vmatprep.mubr.f32.mxu0 0.0
        %601 = vmatmul.mubr.f32.gmra.mxu0 %v528
        %v602 = vpop.f32.mrf.mxu0
        %v603 = vadd.f32 %v523, %v602
        %v604 = vpop.f32.mrf.mxu0
        %v605 = vadd.f32 %v525, %v604
        %606 = vdwg.mxu0
        %607 = vrot.lane.b32.xlu0 %v397, 15
        %v608 = vpop.permute.xlu0 %607
        %609 = vrot.lane.b32.xlu0 %v398, 15
        %v610 = vpop.permute.xlu0 %609
        %vm611 = vcmp.lt.s32.totalorder %v404, 15
        %v612 = vsel %vm611, %v608, %v610
        %v613 = vsel %vm611, %v610, %v608
        %s614 = scalar_lea.vmem %s7, 4
        %v615 = vld [vmem:[%s614] sm:$0x3]
        %v617 = vlaneseq
        %v618 = vshrl.u32 %v617, 7
        %v619 = vsub.s32 0, %v618
        %v620 = vrot.slane %v615, %v619
        %v621 = vlaneseq
        %v622 = vshrl.u32 %v621, 7
        %v623 = vsub.s32 1, %v622
        %v624 = vrot.slane %v615, %v623
        %v627 = vmul.f32 %v613, %v620
        %v628 = vmul.f32 %v612, %v624
        %s629 = scalar_lea.vmem %s3, 8
        %v630 = vld [vmem:[%s629] sm:$0xf]
        %v632 = vsel %vm317, %v630, 0
        %v635 = vsel %vm321, %v627, 0
        %v638 = vsel %vm321, %v628, 0
        %640 = vmatprep.subr.mxu0 0.0
        %641 = vmatpush1.msra.mxu0 0.0
        %642 = vmatprep.subr.mxu0 0.0
        %643 = vmatpush1.msra.mxu0 0.0
        %644 = vmatprep.subr.mxu0 0.0
        %645 = vmatpush1.msra.mxu0 0.0
        %646 = vmatprep.subr.mxu0 0.0
        %647 = vmatpush1.msra.mxu0 0.0
        %648 = vmatprep.subr.mxu0 0.0
        %649 = vmatpush1.msra.mxu0 0.0
        %650 = vmatprep.subr.mxu0 0.0
        %651 = vmatpush1.msra.mxu0 0.0
        %652 = vmatprep.subr.mxu0 0.0
        %653 = vmatpush1.msra.mxu0 0.0
        %654 = vmatprep.subr.mxu0 0.0
        %655 = vmatpush1.msra.mxu0 0.0
        %656 = vmatprep.subr.mxu0 0.0
        %657 = vmatpush1.msra.mxu0 0.0
        %658 = vmatprep.subr.mxu0 0.0
        %659 = vmatpush1.msra.mxu0 0.0
        %660 = vmatprep.subr.mxu0 0.0
        %661 = vmatpush1.msra.mxu0 0.0
        %662 = vmatprep.subr.mxu0 0.0
        %663 = vmatpush1.msra.mxu0 0.0
        %664 = vmatprep.subr.mxu0 0.0
        %665 = vmatpush1.msra.mxu0 0.0
        %666 = vmatprep.subr.mxu0 0.0
        %667 = vmatpush1.msra.mxu0 0.0
        %668 = vmatprep.subr.mxu0 0.0
        %669 = vmatpush1.msra.mxu0 0.0
        %670 = vmatprep.subr.mxu0 %v638
        %671 = vmatpush1.msra.mxu0 %v635
        %672 = vmatprep.subr.mxu0 0.0
        %673 = vmatpush2.msra.mxu0 0.0
        %674 = vmatprep.subr.mxu0 0.0
        %675 = vmatpush2.msra.mxu0 0.0
        %676 = vmatprep.subr.mxu0 0.0
        %677 = vmatpush2.msra.mxu0 0.0
        %678 = vmatprep.subr.mxu0 0.0
        %679 = vmatpush2.msra.mxu0 0.0
        %680 = vmatprep.subr.mxu0 0.0
        %681 = vmatpush2.msra.mxu0 0.0
        %682 = vmatprep.subr.mxu0 0.0
        %683 = vmatpush2.msra.mxu0 0.0
        %684 = vmatprep.subr.mxu0 0.0
        %685 = vmatpush2.msra.mxu0 0.0
        %686 = vmatprep.subr.mxu0 0.0
        %687 = vmatpush2.msra.mxu0 0.0
        %688 = vmatprep.subr.mxu0 0.0
        %689 = vmatpush2.msra.mxu0 0.0
        %690 = vmatprep.subr.mxu0 0.0
        %691 = vmatpush2.msra.mxu0 0.0
        %692 = vmatprep.subr.mxu0 0.0
        %693 = vmatpush2.msra.mxu0 0.0
        %694 = vmatprep.subr.mxu0 0.0
        %695 = vmatpush2.msra.mxu0 0.0
        %696 = vmatprep.subr.mxu0 0.0
        %697 = vmatpush2.msra.mxu0 0.0
        %698 = vmatprep.subr.mxu0 0.0
        %699 = vmatpush2.msra.mxu0 0.0
        %700 = vmatprep.subr.mxu0 0.0
        %701 = vmatpush2.msra.mxu0 0.0
        %702 = vmatprep.subr.mxu0 0.0
        %703 = vmatpush2.msra.mxu0 0.0
        %704 = vmatprep.mubr.f32.mxu0 0.0
        %705 = vmatmul.mubr.f32.gmra.mxu0 %v632
        %v706 = vpop.f32.mrf.mxu0
        %v707 = vadd.f32 0.0, %v706
        %v708 = vpop.f32.mrf.mxu0
        %v709 = vadd.f32 0.0, %v708
        %710 = vdwg.mxu0
        %v711 = vadd.f32 %v603, %v707
        %v712 = vadd.f32 %v605, %v709
        %713 = vrot.lane.b32.xlu0 %v397, 1
        %v714 = vpop.permute.xlu0 %713
        %715 = vrot.lane.b32.xlu0 %v398, 1
        %v716 = vpop.permute.xlu0 %715
        %vm717 = vcmp.lt.s32.totalorder %v404, 1
        %v718 = vsel %vm717, %v714, %v716
        %v719 = vsel %vm717, %v716, %v714
        %s720 = scalar_lea.vmem %s7, 6
        %v721 = vld [vmem:[%s720] sm:$0x3]
        %v723 = vlaneseq
        %v724 = vshrl.u32 %v723, 7
        %v725 = vsub.s32 0, %v724
        %v726 = vrot.slane %v721, %v725
        %v727 = vlaneseq
        %v728 = vshrl.u32 %v727, 7
        %v729 = vsub.s32 1, %v728
        %v730 = vrot.slane %v721, %v729
        %v733 = vmul.f32 %v719, %v726
        %v734 = vmul.f32 %v718, %v730
        %s735 = scalar_lea.vmem %s3, 12
        %v736 = vld [vmem:[%s735] sm:$0xf]
        %v738 = vsel %vm317, %v736, 0
        %v741 = vsel %vm321, %v733, 0
        %v744 = vsel %vm321, %v734, 0
        %746 = vmatprep.subr.mxu0 0.0
        %747 = vmatpush1.msra.mxu0 0.0
        %748 = vmatprep.subr.mxu0 0.0
        %749 = vmatpush1.msra.mxu0 0.0
        %750 = vmatprep.subr.mxu0 0.0
        %751 = vmatpush1.msra.mxu0 0.0
        %752 = vmatprep.subr.mxu0 0.0
        %753 = vmatpush1.msra.mxu0 0.0
        %754 = vmatprep.subr.mxu0 0.0
        %755 = vmatpush1.msra.mxu0 0.0
        %756 = vmatprep.subr.mxu0 0.0
        %757 = vmatpush1.msra.mxu0 0.0
        %758 = vmatprep.subr.mxu0 0.0
        %759 = vmatpush1.msra.mxu0 0.0
        %760 = vmatprep.subr.mxu0 0.0
        %761 = vmatpush1.msra.mxu0 0.0
        %762 = vmatprep.subr.mxu0 0.0
        %763 = vmatpush1.msra.mxu0 0.0
        %764 = vmatprep.subr.mxu0 0.0
        %765 = vmatpush1.msra.mxu0 0.0
        %766 = vmatprep.subr.mxu0 0.0
        %767 = vmatpush1.msra.mxu0 0.0
        %768 = vmatprep.subr.mxu0 0.0
        %769 = vmatpush1.msra.mxu0 0.0
        %770 = vmatprep.subr.mxu0 0.0
        %771 = vmatpush1.msra.mxu0 0.0
        %772 = vmatprep.subr.mxu0 0.0
        %773 = vmatpush1.msra.mxu0 0.0
        %774 = vmatprep.subr.mxu0 0.0
        %775 = vmatpush1.msra.mxu0 0.0
        %776 = vmatprep.subr.mxu0 %v744
        %777 = vmatpush1.msra.mxu0 %v741
        %778 = vmatprep.subr.mxu0 0.0
        %779 = vmatpush2.msra.mxu0 0.0
        %780 = vmatprep.subr.mxu0 0.0
        %781 = vmatpush2.msra.mxu0 0.0
        %782 = vmatprep.subr.mxu0 0.0
        %783 = vmatpush2.msra.mxu0 0.0
        %784 = vmatprep.subr.mxu0 0.0
        %785 = vmatpush2.msra.mxu0 0.0
        %786 = vmatprep.subr.mxu0 0.0
        %787 = vmatpush2.msra.mxu0 0.0
        %788 = vmatprep.subr.mxu0 0.0
        %789 = vmatpush2.msra.mxu0 0.0
        %790 = vmatprep.subr.mxu0 0.0
        %791 = vmatpush2.msra.mxu0 0.0
        %792 = vmatprep.subr.mxu0 0.0
        %793 = vmatpush2.msra.mxu0 0.0
        %794 = vmatprep.subr.mxu0 0.0
        %795 = vmatpush2.msra.mxu0 0.0
        %796 = vmatprep.subr.mxu0 0.0
        %797 = vmatpush2.msra.mxu0 0.0
        %798 = vmatprep.subr.mxu0 0.0
        %799 = vmatpush2.msra.mxu0 0.0
        %800 = vmatprep.subr.mxu0 0.0
        %801 = vmatpush2.msra.mxu0 0.0
        %802 = vmatprep.subr.mxu0 0.0
        %803 = vmatpush2.msra.mxu0 0.0
        %804 = vmatprep.subr.mxu0 0.0
        %805 = vmatpush2.msra.mxu0 0.0
        %806 = vmatprep.subr.mxu0 0.0
        %807 = vmatpush2.msra.mxu0 0.0
        %808 = vmatprep.subr.mxu0 0.0
        %809 = vmatpush2.msra.mxu0 0.0
        %810 = vmatprep.mubr.f32.mxu0 0.0
        %811 = vmatmul.mubr.f32.gmra.mxu0 %v738
        %v812 = vpop.f32.mrf.mxu0
        %v813 = vadd.f32 0.0, %v812
        %v814 = vpop.f32.mrf.mxu0
        %v815 = vadd.f32 0.0, %v814
        %816 = vdwg.mxu0
        %v817 = vadd.f32 %v711, %v813
        %v818 = vadd.f32 %v712, %v815
        %s819 = scalar_lea.vmem %s3, 16
        %v820 = vld [vmem:[%s819] sm:$0xf]
        %v822 = vsel %vm317, %v820, 0
        %v825 = vsel %vm321, %v397, 0
        %v828 = vsel %vm321, %v398, 0
        %830 = vmatprep.subr.mxu0 0.0
        %831 = vmatpush1.msra.mxu0 0.0
        %832 = vmatprep.subr.mxu0 0.0
        %833 = vmatpush1.msra.mxu0 0.0
        %834 = vmatprep.subr.mxu0 0.0
        %835 = vmatpush1.msra.mxu0 0.0
        %836 = vmatprep.subr.mxu0 0.0
        %837 = vmatpush1.msra.mxu0 0.0
        %838 = vmatprep.subr.mxu0 0.0
        %839 = vmatpush1.msra.mxu0 0.0
        %840 = vmatprep.subr.mxu0 0.0
        %841 = vmatpush1.msra.mxu0 0.0
        %842 = vmatprep.subr.mxu0 0.0
        %843 = vmatpush1.msra.mxu0 0.0
        %844 = vmatprep.subr.mxu0 0.0
        %845 = vmatpush1.msra.mxu0 0.0
        %846 = vmatprep.subr.mxu0 0.0
        %847 = vmatpush1.msra.mxu0 0.0
        %848 = vmatprep.subr.mxu0 0.0
        %849 = vmatpush1.msra.mxu0 0.0
        %850 = vmatprep.subr.mxu0 0.0
        %851 = vmatpush1.msra.mxu0 0.0
        %852 = vmatprep.subr.mxu0 0.0
        %853 = vmatpush1.msra.mxu0 0.0
        %854 = vmatprep.subr.mxu0 0.0
        %855 = vmatpush1.msra.mxu0 0.0
        %856 = vmatprep.subr.mxu0 0.0
        %857 = vmatpush1.msra.mxu0 0.0
        %858 = vmatprep.subr.mxu0 0.0
        %859 = vmatpush1.msra.mxu0 0.0
        %860 = vmatprep.subr.mxu0 %v828
        %861 = vmatpush1.msra.mxu0 %v825
        %862 = vmatprep.subr.mxu0 0.0
        %863 = vmatpush2.msra.mxu0 0.0
        %864 = vmatprep.subr.mxu0 0.0
        %865 = vmatpush2.msra.mxu0 0.0
        %866 = vmatprep.subr.mxu0 0.0
        %867 = vmatpush2.msra.mxu0 0.0
        %868 = vmatprep.subr.mxu0 0.0
        %869 = vmatpush2.msra.mxu0 0.0
        %870 = vmatprep.subr.mxu0 0.0
        %871 = vmatpush2.msra.mxu0 0.0
        %872 = vmatprep.subr.mxu0 0.0
        %873 = vmatpush2.msra.mxu0 0.0
        %874 = vmatprep.subr.mxu0 0.0
        %875 = vmatpush2.msra.mxu0 0.0
        %876 = vmatprep.subr.mxu0 0.0
        %877 = vmatpush2.msra.mxu0 0.0
        %878 = vmatprep.subr.mxu0 0.0
        %879 = vmatpush2.msra.mxu0 0.0
        %880 = vmatprep.subr.mxu0 0.0
        %881 = vmatpush2.msra.mxu0 0.0
        %882 = vmatprep.subr.mxu0 0.0
        %883 = vmatpush2.msra.mxu0 0.0
        %884 = vmatprep.subr.mxu0 0.0
        %885 = vmatpush2.msra.mxu0 0.0
        %886 = vmatprep.subr.mxu0 0.0
        %887 = vmatpush2.msra.mxu0 0.0
        %888 = vmatprep.subr.mxu0 0.0
        %889 = vmatpush2.msra.mxu0 0.0
        %890 = vmatprep.subr.mxu0 0.0
        %891 = vmatpush2.msra.mxu0 0.0
        %892 = vmatprep.subr.mxu0 0.0
        %893 = vmatpush2.msra.mxu0 0.0
        %894 = vmatprep.mubr.f32.mxu0 0.0
        %895 = vmatmul.mubr.f32.gmra.mxu0 %v822
        %v896 = vpop.f32.mrf.mxu0
        %v897 = vadd.f32 0.0, %v896
        %v898 = vpop.f32.mrf.mxu0
        %v899 = vadd.f32 0.0, %v898
        %900 = vdwg.mxu0
        %v901 = vadd.f32 %v817, %v897
        %v902 = vadd.f32 %v818, %v899
        %903 = vrot.lane.b32.xlu0 %v397, 127
        %v904 = vpop.permute.xlu0 %903
        %905 = vrot.lane.b32.xlu0 %v398, 127
        %v906 = vpop.permute.xlu0 %905
        %vm907 = vcmp.lt.s32.totalorder %v404, 127
        %v908 = vsel %vm907, %v904, %v906
        %v909 = vsel %vm907, %v906, %v904
        %s910 = scalar_lea.vmem %s7, 10
        %v911 = vld [vmem:[%s910] sm:$0x3]
        %v913 = vlaneseq
        %v914 = vshrl.u32 %v913, 7
        %v915 = vsub.s32 0, %v914
        %v916 = vrot.slane %v911, %v915
        %v917 = vlaneseq
        %v918 = vshrl.u32 %v917, 7
        %v919 = vsub.s32 1, %v918
        %v920 = vrot.slane %v911, %v919
        %v923 = vmul.f32 %v908, %v916
        %v924 = vmul.f32 %v909, %v920
        %s925 = scalar_lea.vmem %s3, 20
        %v926 = vld [vmem:[%s925] sm:$0xf]
        %v928 = vsel %vm317, %v926, 0
        %v931 = vsel %vm321, %v923, 0
        %v934 = vsel %vm321, %v924, 0
        %936 = vmatprep.subr.mxu0 0.0
        %937 = vmatpush1.msra.mxu0 0.0
        %938 = vmatprep.subr.mxu0 0.0
        %939 = vmatpush1.msra.mxu0 0.0
        %940 = vmatprep.subr.mxu0 0.0
        %941 = vmatpush1.msra.mxu0 0.0
        %942 = vmatprep.subr.mxu0 0.0
        %943 = vmatpush1.msra.mxu0 0.0
        %944 = vmatprep.subr.mxu0 0.0
        %945 = vmatpush1.msra.mxu0 0.0
        %946 = vmatprep.subr.mxu0 0.0
        %947 = vmatpush1.msra.mxu0 0.0
        %948 = vmatprep.subr.mxu0 0.0
        %949 = vmatpush1.msra.mxu0 0.0
        %950 = vmatprep.subr.mxu0 0.0
        %951 = vmatpush1.msra.mxu0 0.0
        %952 = vmatprep.subr.mxu0 0.0
        %953 = vmatpush1.msra.mxu0 0.0
        %954 = vmatprep.subr.mxu0 0.0
        %955 = vmatpush1.msra.mxu0 0.0
        %956 = vmatprep.subr.mxu0 0.0
        %957 = vmatpush1.msra.mxu0 0.0
        %958 = vmatprep.subr.mxu0 0.0
        %959 = vmatpush1.msra.mxu0 0.0
        %960 = vmatprep.subr.mxu0 0.0
        %961 = vmatpush1.msra.mxu0 0.0
        %962 = vmatprep.subr.mxu0 0.0
        %963 = vmatpush1.msra.mxu0 0.0
        %964 = vmatprep.subr.mxu0 0.0
        %965 = vmatpush1.msra.mxu0 0.0
        %966 = vmatprep.subr.mxu0 %v934
        %967 = vmatpush1.msra.mxu0 %v931
        %968 = vmatprep.subr.mxu0 0.0
        %969 = vmatpush2.msra.mxu0 0.0
        %970 = vmatprep.subr.mxu0 0.0
        %971 = vmatpush2.msra.mxu0 0.0
        %972 = vmatprep.subr.mxu0 0.0
        %973 = vmatpush2.msra.mxu0 0.0
        %974 = vmatprep.subr.mxu0 0.0
        %975 = vmatpush2.msra.mxu0 0.0
        %976 = vmatprep.subr.mxu0 0.0
        %977 = vmatpush2.msra.mxu0 0.0
        %978 = vmatprep.subr.mxu0 0.0
        %979 = vmatpush2.msra.mxu0 0.0
        %980 = vmatprep.subr.mxu0 0.0
        %981 = vmatpush2.msra.mxu0 0.0
        %982 = vmatprep.subr.mxu0 0.0
        %983 = vmatpush2.msra.mxu0 0.0
        %984 = vmatprep.subr.mxu0 0.0
        %985 = vmatpush2.msra.mxu0 0.0
        %986 = vmatprep.subr.mxu0 0.0
        %987 = vmatpush2.msra.mxu0 0.0
        %988 = vmatprep.subr.mxu0 0.0
        %989 = vmatpush2.msra.mxu0 0.0
        %990 = vmatprep.subr.mxu0 0.0
        %991 = vmatpush2.msra.mxu0 0.0
        %992 = vmatprep.subr.mxu0 0.0
        %993 = vmatpush2.msra.mxu0 0.0
        %994 = vmatprep.subr.mxu0 0.0
        %995 = vmatpush2.msra.mxu0 0.0
        %996 = vmatprep.subr.mxu0 0.0
        %997 = vmatpush2.msra.mxu0 0.0
        %998 = vmatprep.subr.mxu0 0.0
        %999 = vmatpush2.msra.mxu0 0.0
        %1000 = vmatprep.mubr.f32.mxu0 0.0
        %1001 = vmatmul.mubr.f32.gmra.mxu0 %v928
        %v1002 = vpop.f32.mrf.mxu0
        %v1003 = vadd.f32 0.0, %v1002
        %v1004 = vpop.f32.mrf.mxu0
        %v1005 = vadd.f32 0.0, %v1004
        %1006 = vdwg.mxu0
        %v1007 = vadd.f32 %v901, %v1003
        %v1008 = vadd.f32 %v902, %v1005
        %1009 = vrot.lane.b32.xlu0 %v397, 113
        %v1010 = vpop.permute.xlu0 %1009
        %1011 = vrot.lane.b32.xlu0 %v398, 113
        %v1012 = vpop.permute.xlu0 %1011
        %vm1013 = vcmp.lt.s32.totalorder %v404, 113
        %v1014 = vsel %vm1013, %v1010, %v1012
        %v1015 = vsel %vm1013, %v1012, %v1010
        %s1016 = scalar_lea.vmem %s7, 12
        %v1017 = vld [vmem:[%s1016] sm:$0x3]
        %v1019 = vlaneseq
        %v1020 = vshrl.u32 %v1019, 7
        %v1021 = vsub.s32 0, %v1020
        %v1022 = vrot.slane %v1017, %v1021
        %v1023 = vlaneseq
        %v1024 = vshrl.u32 %v1023, 7
        %v1025 = vsub.s32 1, %v1024
        %v1026 = vrot.slane %v1017, %v1025
        %v1029 = vmul.f32 %v1014, %v1022
        %v1030 = vmul.f32 %v1015, %v1026
        %s1031 = scalar_lea.vmem %s3, 24
        %v1032 = vld [vmem:[%s1031] sm:$0xf]
        %v1034 = vsel %vm317, %v1032, 0
        %v1037 = vsel %vm321, %v1029, 0
        %v1040 = vsel %vm321, %v1030, 0
        %1042 = vmatprep.subr.mxu0 0.0
        %1043 = vmatpush1.msra.mxu0 0.0
        %1044 = vmatprep.subr.mxu0 0.0
        %1045 = vmatpush1.msra.mxu0 0.0
        %1046 = vmatprep.subr.mxu0 0.0
        %1047 = vmatpush1.msra.mxu0 0.0
        %1048 = vmatprep.subr.mxu0 0.0
        %1049 = vmatpush1.msra.mxu0 0.0
        %1050 = vmatprep.subr.mxu0 0.0
        %1051 = vmatpush1.msra.mxu0 0.0
        %1052 = vmatprep.subr.mxu0 0.0
        %1053 = vmatpush1.msra.mxu0 0.0
        %1054 = vmatprep.subr.mxu0 0.0
        %1055 = vmatpush1.msra.mxu0 0.0
        %1056 = vmatprep.subr.mxu0 0.0
        %1057 = vmatpush1.msra.mxu0 0.0
        %1058 = vmatprep.subr.mxu0 0.0
        %1059 = vmatpush1.msra.mxu0 0.0
        %1060 = vmatprep.subr.mxu0 0.0
        %1061 = vmatpush1.msra.mxu0 0.0
        %1062 = vmatprep.subr.mxu0 0.0
        %1063 = vmatpush1.msra.mxu0 0.0
        %1064 = vmatprep.subr.mxu0 0.0
        %1065 = vmatpush1.msra.mxu0 0.0
        %1066 = vmatprep.subr.mxu0 0.0
        %1067 = vmatpush1.msra.mxu0 0.0
        %1068 = vmatprep.subr.mxu0 0.0
        %1069 = vmatpush1.msra.mxu0 0.0
        %1070 = vmatprep.subr.mxu0 0.0
        %1071 = vmatpush1.msra.mxu0 0.0
        %1072 = vmatprep.subr.mxu0 %v1040
        %1073 = vmatpush1.msra.mxu0 %v1037
        %1074 = vmatprep.subr.mxu0 0.0
        %1075 = vmatpush2.msra.mxu0 0.0
        %1076 = vmatprep.subr.mxu0 0.0
        %1077 = vmatpush2.msra.mxu0 0.0
        %1078 = vmatprep.subr.mxu0 0.0
        %1079 = vmatpush2.msra.mxu0 0.0
        %1080 = vmatprep.subr.mxu0 0.0
        %1081 = vmatpush2.msra.mxu0 0.0
        %1082 = vmatprep.subr.mxu0 0.0
        %1083 = vmatpush2.msra.mxu0 0.0
        %1084 = vmatprep.subr.mxu0 0.0
        %1085 = vmatpush2.msra.mxu0 0.0
        %1086 = vmatprep.subr.mxu0 0.0
        %1087 = vmatpush2.msra.mxu0 0.0
        %1088 = vmatprep.subr.mxu0 0.0
        %1089 = vmatpush2.msra.mxu0 0.0
        %1090 = vmatprep.subr.mxu0 0.0
        %1091 = vmatpush2.msra.mxu0 0.0
        %1092 = vmatprep.subr.mxu0 0.0
        %1093 = vmatpush2.msra.mxu0 0.0
        %1094 = vmatprep.subr.mxu0 0.0
        %1095 = vmatpush2.msra.mxu0 0.0
        %1096 = vmatprep.subr.mxu0 0.0
        %1097 = vmatpush2.msra.mxu0 0.0
        %1098 = vmatprep.subr.mxu0 0.0
        %1099 = vmatpush2.msra.mxu0 0.0
        %1100 = vmatprep.subr.mxu0 0.0
        %1101 = vmatpush2.msra.mxu0 0.0
        %1102 = vmatprep.subr.mxu0 0.0
        %1103 = vmatpush2.msra.mxu0 0.0
        %1104 = vmatprep.subr.mxu0 0.0
        %1105 = vmatpush2.msra.mxu0 0.0
        %1106 = vmatprep.mubr.f32.mxu0 0.0
        %1107 = vmatmul.mubr.f32.gmra.mxu0 %v1034
        %v1108 = vpop.f32.mrf.mxu0
        %v1109 = vadd.f32 0.0, %v1108
        %v1110 = vpop.f32.mrf.mxu0
        %v1111 = vadd.f32 0.0, %v1110
        %1112 = vdwg.mxu0
        %v1113 = vadd.f32 %v1007, %v1109
        %v1114 = vadd.f32 %v1008, %v1111
        %1115 = vrot.lane.b32.xlu0 %v397, 112
        %v1116 = vpop.permute.xlu0 %1115
        %1117 = vrot.lane.b32.xlu0 %v398, 112
        %v1118 = vpop.permute.xlu0 %1117
        %vm1119 = vcmp.lt.s32.totalorder %v404, 112
        %v1120 = vsel %vm1119, %v1116, %v1118
        %v1121 = vsel %vm1119, %v1118, %v1116
        %s1122 = scalar_lea.vmem %s7, 14
        %v1123 = vld [vmem:[%s1122] sm:$0x3]
        %v1125 = vlaneseq
        %v1126 = vshrl.u32 %v1125, 7
        %v1127 = vsub.s32 0, %v1126
        %v1128 = vrot.slane %v1123, %v1127
        %v1129 = vlaneseq
        %v1130 = vshrl.u32 %v1129, 7
        %v1131 = vsub.s32 1, %v1130
        %v1132 = vrot.slane %v1123, %v1131
        %v1135 = vmul.f32 %v1120, %v1128
        %v1136 = vmul.f32 %v1121, %v1132
        %s1137 = scalar_lea.vmem %s3, 28
        %v1138 = vld [vmem:[%s1137] sm:$0xf]
        %v1140 = vsel %vm317, %v1138, 0
        %v1143 = vsel %vm321, %v1135, 0
        %v1146 = vsel %vm321, %v1136, 0
        %1148 = vmatprep.subr.mxu0 0.0
        %1149 = vmatpush1.msra.mxu0 0.0
        %1150 = vmatprep.subr.mxu0 0.0
        %1151 = vmatpush1.msra.mxu0 0.0
        %1152 = vmatprep.subr.mxu0 0.0
        %1153 = vmatpush1.msra.mxu0 0.0
        %1154 = vmatprep.subr.mxu0 0.0
        %1155 = vmatpush1.msra.mxu0 0.0
        %1156 = vmatprep.subr.mxu0 0.0
        %1157 = vmatpush1.msra.mxu0 0.0
        %1158 = vmatprep.subr.mxu0 0.0
        %1159 = vmatpush1.msra.mxu0 0.0
        %1160 = vmatprep.subr.mxu0 0.0
        %1161 = vmatpush1.msra.mxu0 0.0
        %1162 = vmatprep.subr.mxu0 0.0
        %1163 = vmatpush1.msra.mxu0 0.0
        %1164 = vmatprep.subr.mxu0 0.0
        %1165 = vmatpush1.msra.mxu0 0.0
        %1166 = vmatprep.subr.mxu0 0.0
        %1167 = vmatpush1.msra.mxu0 0.0
        %1168 = vmatprep.subr.mxu0 0.0
        %1169 = vmatpush1.msra.mxu0 0.0
        %1170 = vmatprep.subr.mxu0 0.0
        %1171 = vmatpush1.msra.mxu0 0.0
        %1172 = vmatprep.subr.mxu0 0.0
        %1173 = vmatpush1.msra.mxu0 0.0
        %1174 = vmatprep.subr.mxu0 0.0
        %1175 = vmatpush1.msra.mxu0 0.0
        %1176 = vmatprep.subr.mxu0 0.0
        %1177 = vmatpush1.msra.mxu0 0.0
        %1178 = vmatprep.subr.mxu0 %v1146
        %1179 = vmatpush1.msra.mxu0 %v1143
        %1180 = vmatprep.subr.mxu0 0.0
        %1181 = vmatpush2.msra.mxu0 0.0
        %1182 = vmatprep.subr.mxu0 0.0
        %1183 = vmatpush2.msra.mxu0 0.0
        %1184 = vmatprep.subr.mxu0 0.0
        %1185 = vmatpush2.msra.mxu0 0.0
        %1186 = vmatprep.subr.mxu0 0.0
        %1187 = vmatpush2.msra.mxu0 0.0
        %1188 = vmatprep.subr.mxu0 0.0
        %1189 = vmatpush2.msra.mxu0 0.0
        %1190 = vmatprep.subr.mxu0 0.0
        %1191 = vmatpush2.msra.mxu0 0.0
        %1192 = vmatprep.subr.mxu0 0.0
        %1193 = vmatpush2.msra.mxu0 0.0
        %1194 = vmatprep.subr.mxu0 0.0
        %1195 = vmatpush2.msra.mxu0 0.0
        %1196 = vmatprep.subr.mxu0 0.0
        %1197 = vmatpush2.msra.mxu0 0.0
        %1198 = vmatprep.subr.mxu0 0.0
        %1199 = vmatpush2.msra.mxu0 0.0
        %1200 = vmatprep.subr.mxu0 0.0
        %1201 = vmatpush2.msra.mxu0 0.0
        %1202 = vmatprep.subr.mxu0 0.0
        %1203 = vmatpush2.msra.mxu0 0.0
        %1204 = vmatprep.subr.mxu0 0.0
        %1205 = vmatpush2.msra.mxu0 0.0
        %1206 = vmatprep.subr.mxu0 0.0
        %1207 = vmatpush2.msra.mxu0 0.0
        %1208 = vmatprep.subr.mxu0 0.0
        %1209 = vmatpush2.msra.mxu0 0.0
        %1210 = vmatprep.subr.mxu0 0.0
        %1211 = vmatpush2.msra.mxu0 0.0
        %1212 = vmatprep.mubr.f32.mxu0 0.0
        %1213 = vmatmul.mubr.f32.gmra.mxu0 %v1140
        %v1214 = vpop.f32.mrf.mxu0
        %v1215 = vadd.f32 0.0, %v1214
        %v1216 = vpop.f32.mrf.mxu0
        %v1217 = vadd.f32 0.0, %v1216
        %1218 = vdwg.mxu0
        %v1219 = vadd.f32 %v1113, %v1215
        %v1220 = vadd.f32 %v1114, %v1217
        %1221 = vrot.lane.b32.xlu0 %v397, 111
        %v1222 = vpop.permute.xlu0 %1221
        %1223 = vrot.lane.b32.xlu0 %v398, 111
        %v1224 = vpop.permute.xlu0 %1223
        %vm1225 = vcmp.lt.s32.totalorder %v404, 111
        %v1226 = vsel %vm1225, %v1222, %v1224
        %v1227 = vsel %vm1225, %v1224, %v1222
        %s1228 = scalar_lea.vmem %s7, 16
        %v1229 = vld [vmem:[%s1228] sm:$0x3]
        %v1231 = vlaneseq
        %v1232 = vshrl.u32 %v1231, 7
        %v1233 = vsub.s32 0, %v1232
        %v1234 = vrot.slane %v1229, %v1233
        %v1235 = vlaneseq
        %v1236 = vshrl.u32 %v1235, 7
        %v1237 = vsub.s32 1, %v1236
        %v1238 = vrot.slane %v1229, %v1237
        %v1241 = vmul.f32 %v1226, %v1234
        %v1242 = vmul.f32 %v1227, %v1238
        %s1243 = scalar_lea.vmem %s3, 32
        %v1244 = vld [vmem:[%s1243] sm:$0xf]
        %v1246 = vsel %vm317, %v1244, 0
        %v1249 = vsel %vm321, %v1241, 0
        %v1252 = vsel %vm321, %v1242, 0
        %1254 = vmatprep.subr.mxu0 0.0
        %1255 = vmatpush1.msra.mxu0 0.0
        %1256 = vmatprep.subr.mxu0 0.0
        %1257 = vmatpush1.msra.mxu0 0.0
        %1258 = vmatprep.subr.mxu0 0.0
        %1259 = vmatpush1.msra.mxu0 0.0
        %1260 = vmatprep.subr.mxu0 0.0
        %1261 = vmatpush1.msra.mxu0 0.0
        %1262 = vmatprep.subr.mxu0 0.0
        %1263 = vmatpush1.msra.mxu0 0.0
        %1264 = vmatprep.subr.mxu0 0.0
        %1265 = vmatpush1.msra.mxu0 0.0
        %1266 = vmatprep.subr.mxu0 0.0
        %1267 = vmatpush1.msra.mxu0 0.0
        %1268 = vmatprep.subr.mxu0 0.0
        %1269 = vmatpush1.msra.mxu0 0.0
        %1270 = vmatprep.subr.mxu0 0.0
        %1271 = vmatpush1.msra.mxu0 0.0
        %1272 = vmatprep.subr.mxu0 0.0
        %1273 = vmatpush1.msra.mxu0 0.0
        %1274 = vmatprep.subr.mxu0 0.0
        %1275 = vmatpush1.msra.mxu0 0.0
        %1276 = vmatprep.subr.mxu0 0.0
        %1277 = vmatpush1.msra.mxu0 0.0
        %1278 = vmatprep.subr.mxu0 0.0
        %1279 = vmatpush1.msra.mxu0 0.0
        %1280 = vmatprep.subr.mxu0 0.0
        %1281 = vmatpush1.msra.mxu0 0.0
        %1282 = vmatprep.subr.mxu0 0.0
        %1283 = vmatpush1.msra.mxu0 0.0
        %1284 = vmatprep.subr.mxu0 %v1252
        %1285 = vmatpush1.msra.mxu0 %v1249
        %1286 = vmatprep.subr.mxu0 0.0
        %1287 = vmatpush2.msra.mxu0 0.0
        %1288 = vmatprep.subr.mxu0 0.0
        %1289 = vmatpush2.msra.mxu0 0.0
        %1290 = vmatprep.subr.mxu0 0.0
        %1291 = vmatpush2.msra.mxu0 0.0
        %1292 = vmatprep.subr.mxu0 0.0
        %1293 = vmatpush2.msra.mxu0 0.0
        %1294 = vmatprep.subr.mxu0 0.0
        %1295 = vmatpush2.msra.mxu0 0.0
        %1296 = vmatprep.subr.mxu0 0.0
        %1297 = vmatpush2.msra.mxu0 0.0
        %1298 = vmatprep.subr.mxu0 0.0
        %1299 = vmatpush2.msra.mxu0 0.0
        %1300 = vmatprep.subr.mxu0 0.0
        %1301 = vmatpush2.msra.mxu0 0.0
        %1302 = vmatprep.subr.mxu0 0.0
        %1303 = vmatpush2.msra.mxu0 0.0
        %1304 = vmatprep.subr.mxu0 0.0
        %1305 = vmatpush2.msra.mxu0 0.0
        %1306 = vmatprep.subr.mxu0 0.0
        %1307 = vmatpush2.msra.mxu0 0.0
        %1308 = vmatprep.subr.mxu0 0.0
        %1309 = vmatpush2.msra.mxu0 0.0
        %1310 = vmatprep.subr.mxu0 0.0
        %1311 = vmatpush2.msra.mxu0 0.0
        %1312 = vmatprep.subr.mxu0 0.0
        %1313 = vmatpush2.msra.mxu0 0.0
        %1314 = vmatprep.subr.mxu0 0.0
        %1315 = vmatpush2.msra.mxu0 0.0
        %1316 = vmatprep.subr.mxu0 0.0
        %1317 = vmatpush2.msra.mxu0 0.0
        %1318 = vmatprep.mubr.f32.mxu0 0.0
        %1319 = vmatmul.mubr.f32.gmra.mxu0 %v1246
        %v1320 = vpop.f32.mrf.mxu0
        %v1321 = vadd.f32 0.0, %v1320
        %v1322 = vpop.f32.mrf.mxu0
        %v1323 = vadd.f32 0.0, %v1322
        %1324 = vdwg.mxu0
        %v1325 = vadd.f32 %v1219, %v1321
        %v1326 = vadd.f32 %v1220, %v1323
        %v1327 = vld [vmem:[%s4] sm:$0xf]
        %1329 = vset.pattern.permute.xlu0 0
        %1330 = vperm.xlu0 %1329, %v1327
        %v1331 = vpop.permute.xlu0 %1330
        %v1333 = vadd.f32 %v1325, %v1331
        %v1334 = vadd.f32 %v1326, %v1331
        %v1335 = vmax.f32 %v1333, 0.0
        %v1336 = vmax.f32 %v1334, 0.0
        %v1337 = vld [vmem:[%s5] sm:$0xf]
        %v1338 = vld [vmem:[%s6] sm:$0xf]
        %1340 = vset.pattern.permute.xlu0 0
        %1341 = vperm.xlu0 %1340, %v1338
        %v1342 = vpop.permute.xlu0 %1341
        %v1345 = vsel %vm317, %v1337, 0
        %v1348 = vsel %vm321, %v1335, 0
        %v1351 = vsel %vm321, %v1336, 0
        %1353 = vmatprep.subr.mxu0 0.0
        %1354 = vmatpush1.msra.mxu0 0.0
        %1355 = vmatprep.subr.mxu0 0.0
        %1356 = vmatpush1.msra.mxu0 0.0
        %1357 = vmatprep.subr.mxu0 0.0
        %1358 = vmatpush1.msra.mxu0 0.0
        %1359 = vmatprep.subr.mxu0 0.0
        %1360 = vmatpush1.msra.mxu0 0.0
        %1361 = vmatprep.subr.mxu0 0.0
        %1362 = vmatpush1.msra.mxu0 0.0
        %1363 = vmatprep.subr.mxu0 0.0
        %1364 = vmatpush1.msra.mxu0 0.0
        %1365 = vmatprep.subr.mxu0 0.0
        %1366 = vmatpush1.msra.mxu0 0.0
        %1367 = vmatprep.subr.mxu0 0.0
        %1368 = vmatpush1.msra.mxu0 0.0
        %1369 = vmatprep.subr.mxu0 0.0
        %1370 = vmatpush1.msra.mxu0 0.0
        %1371 = vmatprep.subr.mxu0 0.0
        %1372 = vmatpush1.msra.mxu0 0.0
        %1373 = vmatprep.subr.mxu0 0.0
        %1374 = vmatpush1.msra.mxu0 0.0
        %1375 = vmatprep.subr.mxu0 0.0
        %1376 = vmatpush1.msra.mxu0 0.0
        %1377 = vmatprep.subr.mxu0 0.0
        %1378 = vmatpush1.msra.mxu0 0.0
        %1379 = vmatprep.subr.mxu0 0.0
        %1380 = vmatpush1.msra.mxu0 0.0
        %1381 = vmatprep.subr.mxu0 0.0
        %1382 = vmatpush1.msra.mxu0 0.0
        %1383 = vmatprep.subr.mxu0 %v1351
        %1384 = vmatpush1.msra.mxu0 %v1348
        %1385 = vmatprep.subr.mxu0 0.0
        %1386 = vmatpush2.msra.mxu0 0.0
        %1387 = vmatprep.subr.mxu0 0.0
        %1388 = vmatpush2.msra.mxu0 0.0
        %1389 = vmatprep.subr.mxu0 0.0
        %1390 = vmatpush2.msra.mxu0 0.0
        %1391 = vmatprep.subr.mxu0 0.0
        %1392 = vmatpush2.msra.mxu0 0.0
        %1393 = vmatprep.subr.mxu0 0.0
        %1394 = vmatpush2.msra.mxu0 0.0
        %1395 = vmatprep.subr.mxu0 0.0
        %1396 = vmatpush2.msra.mxu0 0.0
        %1397 = vmatprep.subr.mxu0 0.0
        %1398 = vmatpush2.msra.mxu0 0.0
        %1399 = vmatprep.subr.mxu0 0.0
        %1400 = vmatpush2.msra.mxu0 0.0
        %1401 = vmatprep.subr.mxu0 0.0
        %1402 = vmatpush2.msra.mxu0 0.0
        %1403 = vmatprep.subr.mxu0 0.0
        %1404 = vmatpush2.msra.mxu0 0.0
        %1405 = vmatprep.subr.mxu0 0.0
        %1406 = vmatpush2.msra.mxu0 0.0
        %1407 = vmatprep.subr.mxu0 0.0
        %1408 = vmatpush2.msra.mxu0 0.0
        %1409 = vmatprep.subr.mxu0 0.0
        %1410 = vmatpush2.msra.mxu0 0.0
        %1411 = vmatprep.subr.mxu0 0.0
        %1412 = vmatpush2.msra.mxu0 0.0
        %1413 = vmatprep.subr.mxu0 0.0
        %1414 = vmatpush2.msra.mxu0 0.0
        %1415 = vmatprep.subr.mxu0 0.0
        %1416 = vmatpush2.msra.mxu0 0.0
        %1417 = vmatprep.mubr.f32.mxu0 0.0
        %1418 = vmatmul.mubr.f32.gmra.mxu0 %v1345
        %v1419 = vpop.f32.mrf.mxu0
        %v1420 = vadd.f32 %v1342, %v1419
        %v1421 = vpop.f32.mrf.mxu0
        %v1422 = vadd.f32 %v1342, %v1421
        %1423 = vdwg.mxu0
        %v1425 = vadd.f32 %v1420, %v307
        %v1426 = vadd.f32 %v1422, %v316
        %v1429 = vcombine.low %v1425, %v1426
        %1431 = vst [vmem:[%s299] sm:$0xff] %v1429
        %s1432 = sand.u32 %s203, 1
        %s1433 = scalar_lea.sflag [#allocation3], %s1432
        %s1434 = sand.u32 %s203, 1
        %s1435 = smul.addr %s1434, 8
        %s1436 = scalar_lea.vmem [#allocation2], %s1435
        // Predicated region
        $region53: #{tpu_custom_call.1} parent=51 // pred_check
          %p1437 = pneg %p213
        $region54: #{tpu_custom_call.1} parent=51 // pred_check_branch
          %1439 = sbr.rel (%p1437) target = $region56
        $region55: #{tpu_custom_call.1} parent=51 // pred_region
          %s1440 = smul.u32 2, %s22
          %s1442 = ssub.s32 128, 128
          %1443 = vsyncadd %s1433, %s1442
          %s1444 = smul.addr %s1440, 64
          %s1445 = scalar_lea.hbm %s8, %s1444
          %s1447 = sshll.u32 %s1436, 4
          %s1448 = int_to_ptr.vmem [resolvable:$true] %s1447
          %1450 = dma.vmem_to_hbm [thread:$0]  %s1448, 128, %s1445, %s1433
        $region56: #{tpu_custom_call.1} parent=51 // pred_fallthru
          _
      $region52: #{tpu_custom_call.1} parent=5 // pred_fallthru
        _
      %p1451 = scmp.le.s32.totalorder 2, %s17
      // Predicated region
      $region57: #{tpu_custom_call.1} parent=5 // pred_check
        %p1452 = pneg %p1451
      $region58: #{tpu_custom_call.1} parent=5 // pred_check_branch
        %1454 = sbr.rel (%p1452) target = $region60
      $region59: #{tpu_custom_call.1} parent=5 // pred_region
        %s1455 = ssub.s32 %s17, 2
        // Predicated region
        $region61: #{tpu_custom_call.1} parent=59 // pred_check
          %p1456 = pneg %p219
        $region62: #{tpu_custom_call.1} parent=59 // pred_check_branch
          %1458 = sbr.rel (%p1456) target = $region64
        $region63: #{tpu_custom_call.1} parent=59 // pred_region
          %s1459 = sand.u32 %s204, 1
          %s1460 = scalar_lea.sflag [#allocation3], %s1459
          %s1461 = sand.u32 %s204, 1
          %s1462 = smul.addr %s1461, 8
          %s1463 = scalar_lea.vmem [#allocation2], %s1462
          %1464 = dma.done %s1460, 128
        $region64: #{tpu_custom_call.1} parent=59 // pred_fallthru
          _
      $region60: #{tpu_custom_call.1} parent=5 // pred_fallthru
        _
    $region6: #{tpu_custom_call.1} parent=1 // loop_footer
      %s21 = sadd.s32 1, %s17
    $region7: #{tpu_custom_call.1} parent=1 // loop_footer_branch
      %16 = sbr.rel target = $region3
    $region8: #{tpu_custom_call.1} parent=1 // loop_exit
      _
    %1465 = vsyncpa [#allocation3], 1
    %s1466 = scalar_lea.sflag [#allocation3], 1
    %1467 = vsyncpa %s1466, 1

</llo_original>
